<compile_context>
chip_gen: v5e
topology: v5e:2x2
jax: 0.10.0
libtpu: 0.0.40
codegen_flags: <defaults>
</compile_context>

<pallas_src>
import math
from functools import partial

import numpy as np
import jax
import jax.numpy as jnp
from jax import lax
from jax.experimental import pallas as pl
from jax.experimental.pallas import tpu as pltpu

_BN_EPS = 1e-5


# ---------------------------------------------------------------------------
# Static helpers (host-side numpy): tap validity masks and the align_corners
# bilinear interpolation matrices.
# ---------------------------------------------------------------------------
def _tap_masks(H, W):
    """(9, H*W) f32 masks: tap t=(dy+1)*3+(dx+1) is valid where the source
    pixel (i+dy, j+dx) lies inside the image (zero padding elsewhere)."""
    masks = np.zeros((9, H, W), np.float32)
    t = 0
    for dy in (-1, 0, 1):
        for dx in (-1, 0, 1):
            r0, r1 = max(0, -dy), min(H, H - dy)
            c0, c1 = max(0, -dx), min(W, W - dx)
            masks[t, r0:r1, c0:c1] = 1.0
            t += 1
    return masks.reshape(9, H * W)


def _interp_matrix(out_size, in_size):
    """R (out, in) such that R @ v == 1-D bilinear resize, align_corners=True."""
    if out_size == 1:
        src = np.zeros((1,), np.float64)
    else:
        src = np.arange(out_size, dtype=np.float64) * (in_size - 1) / (out_size - 1)
    p0 = np.clip(np.floor(src).astype(np.int64), 0, in_size - 1)
    p1 = np.minimum(p0 + 1, in_size - 1)
    frac = (src - p0).astype(np.float32)
    R = np.zeros((out_size, in_size), np.float32)
    R[np.arange(out_size), p0] += 1.0 - frac
    R[np.arange(out_size), p1] += frac
    return R


# ---------------------------------------------------------------------------
# In-kernel 3x3 conv (stride 1, pad 1, no bias) on a channel-major slab.
# ---------------------------------------------------------------------------
def _conv3x3(x, w_ref, m_ref, *, c_out, img_w, size, compute_dtype):
    """x: (c_in, size) with size = b*H*W.  Each tap is a static lane rotation
    of the whole slab + a (c_out, c_in) @ (c_in, size) MXU matmul; m_ref holds
    a (1, size) validity mask per tap (zero-padding + batch-boundary wraps)."""
    acc = jnp.zeros((c_out, size), jnp.float32)
    t = 0
    for dy in (-1, 0, 1):
        for dx in (-1, 0, 1):
            d = dy * img_w + dx
            # shifted[:, o] == x[:, (o + d) mod size]; wrap positions are masked.
            shifted = x if d == 0 else pltpu.roll(x, (-d) % size, 1)
            contrib = jnp.dot(w_ref[t].astype(compute_dtype),
                              shifted.astype(compute_dtype),
                              preferred_element_type=jnp.float32)
            if d == 0:
                acc = acc + contrib                      # center tap: always valid
            else:
                acc = acc + contrib * m_ref[pl.ds(t, 1)]  # (1, size) mask
            t += 1
    return acc


def _bn_apply(y, gamma, beta, inv_count):
    """Train-mode BatchNorm: normalize with this batch's (biased) statistics."""
    mean = jnp.sum(y, axis=1, keepdims=True) * inv_count              # (c, 1)
    var = jnp.sum(y * y, axis=1, keepdims=True) * inv_count - mean * mean
    scale = gamma * lax.rsqrt(jnp.maximum(var, 0.0) + _BN_EPS)        # (c, 1)
    return y * scale + (beta - mean * scale)


# ---------------------------------------------------------------------------
# Fused Decoder kernel: fc1 -> BN1 -> ReLU -> +bilinear(x0) -> fc2 -> BN2 ->
# ReLU -> fc3.  Everything stays in VMEM.
# ---------------------------------------------------------------------------
def decoder_kernel(x_ref, x0_ref, kT_ref, m_ref,
                   w1_ref, g1_ref, be1_ref,
                   w2_ref, g2_ref, be2_ref,
                   w3_ref, b3_ref,
                   xfeat_ref, out_ref,
                   *, b, c_out, img_w, n, size, inv_count, compute_dtype):
    # Fold batch into the lane axis -> (c_in, b*H*W), concat at 128-aligned cuts.
    x = x_ref[0] if b == 1 else jnp.concatenate(
        [x_ref[i] for i in range(b)], axis=1)

    # fc1: 3x3 conv + BN1 (batch stats) + ReLU.
    y1 = _conv3x3(x, w1_ref, m_ref, c_out=c_out, img_w=img_w, size=size,
                  compute_dtype=compute_dtype)
    z = jnp.maximum(_bn_apply(y1, g1_ref[...], be1_ref[...], inv_count), 0.0)

    # + bilinear(x0, align_corners=True): one MXU matmul per batch element.
    itp = [jnp.dot(x0_ref[i], kT_ref[...], preferred_element_type=jnp.float32)
           for i in range(b)]
    z = z + (itp[0] if b == 1 else jnp.concatenate(itp, axis=1))

    # fc2: 3x3 conv + BN2 (batch stats) + ReLU.   (Dropout2d -> identity)
    y2 = _conv3x3(z, w2_ref, m_ref, c_out=c_out, img_w=img_w, size=size,
                  compute_dtype=compute_dtype)
    xf = jnp.maximum(_bn_apply(y2, g2_ref[...], be2_ref[...], inv_count), 0.0)

    # fc3: 1x1 conv + bias (f32).
    o = jnp.dot(w3_ref[...], xf, preferred_element_type=jnp.float32) + b3_ref[...]

    # Un-fold the batch with static 128-aligned lane slices.
    for i in range(b):
        xfeat_ref[i] = xf[:, i * n:(i + 1) * n]
        out_ref[i] = o[:, i * n:(i + 1) * n]


# ---------------------------------------------------------------------------
# Wrapper
# ---------------------------------------------------------------------------
def decoder_forward(x0, x, params, *, compute_dtype=jnp.bfloat16):
    """x: (b, c_in, H, W); x0: (b, c_out, h0, w0).  Returns (x_feat, output)
    with x_feat (b, c_out, H, W) and output (b, 1, H, W), matching Decoder."""
    b, c_in, H, W = x.shape
    b0, c_out, h0, w0 = x0.shape
    assert b0 == b
    n = H * W                 # keep H*W a multiple of 128 for lane density
    size = b * n
    m = h0 * w0

    masks = jnp.asarray(np.tile(_tap_masks(H, W), (1, b)))          # (9, b*H*W)
    kT = jnp.asarray(np.kron(_interp_matrix(H, h0),
                             _interp_matrix(W, w0)).T)              # (h0*w0, H*W)

    kernel = partial(decoder_kernel, b=b, c_out=c_out, img_w=W, n=n, size=size,
                     inv_count=1.0 / size, compute_dtype=compute_dtype)

    # No grid: the whole (tiny) working set lives in VMEM for one invocation.
    x_feat, out = pl.pallas_call(
        kernel,
        out_shape=(jax.ShapeDtypeStruct((b, c_out, n), jnp.float32),
                   jax.ShapeDtypeStruct((b, 1, n), jnp.float32)),
    )(x.reshape(b, c_in, n), x0.reshape(b, c_out, m), kT, masks,
      params["w1"], params["gamma1"], params["beta1"],
      params["w2"], params["gamma2"], params["beta2"],
      params["w3"], params["b3"])

    return x_feat.reshape(b, c_out, H, W), out.reshape(b, 1, H, W)


# ---------------------------------------------------------------------------
# Deterministic parameter construction (mirrors Decoder's module shapes).
# Conv weights are stored tap-major: (9, c_out, c_in), tap t = (dy+1)*3+(dx+1);
# a PyTorch (c_out, c_in, 3, 3) weight maps via w.transpose(2,3,0,1).reshape.
# ---------------------------------------------------------------------------
def make_params(c_in, c_out, key):
    k1, k2, k3, k4 = jax.random.split(key, 4)
    w1 = jax.random.normal(k1, (9, c_out, c_in), jnp.float32) * math.sqrt(2.0 / (9 * c_in))
    w2 = jax.random.normal(k2, (9, c_out, c_out), jnp.float32) * math.sqrt(2.0 / (9 * c_out))
    w3 = jax.random.normal(k3, (1, c_out), jnp.float32) * math.sqrt(1.0 / c_out)
    b3 = jax.random.uniform(k4, (1, 1), jnp.float32,
                            minval=-1.0 / math.sqrt(c_out), maxval=1.0 / math.sqrt(c_out))
    gamma1 = jnp.ones((c_out, 1), jnp.float32)
    beta1 = jnp.zeros((c_out, 1), jnp.float32)
    gamma2 = jnp.ones((c_out, 1), jnp.float32)
    beta2 = jnp.zeros((c_out, 1), jnp.float32)
    return dict(w1=w1, w2=w2, w3=w3, b3=b3,
                gamma1=gamma1, beta1=beta1, gamma2=gamma2, beta2=beta2)


if __name__ == "__main__":
    b, c_in, c_out, H, W = 2, 8, 4, 16, 16      # b*H*W = 512 lanes (lane-dense)
    h0, w0 = 8, 8                               # low-res skip input
    key = jax.random.PRNGKey(0)
    kx, kx0, kp = jax.random.split(key, 3)
    x = jax.random.normal(kx, (b, c_in, H, W), jnp.float32)
    x0 = jax.random.normal(kx0, (b, c_out, h0, w0), jnp.float32)
    params = make_params(c_in, c_out, kp)

    fwd = jax.jit(decoder_forward)
    x_feat, out = fwd(x0, x, params)
    jax.block_until_ready((x_feat, out))

    assert x_feat.shape == (b, c_out, H, W)
    assert out.shape == (b, 1, H, W)
    assert bool(jnp.all(jnp.isfinite(x_feat))) and bool(jnp.all(jnp.isfinite(out)))
    print("KERNEL_OK")
</pallas_src>

<mosaic_0001>
module attributes {stable_mosaic.version = 11 : i64} {
  func.func @decoder_kernel(%arg0: memref<2x8x256xf32, #tpu.memory_space<vmem>>, %arg1: memref<2x4x64xf32, #tpu.memory_space<vmem>>, %arg2: memref<64x256xf32, #tpu.memory_space<vmem>>, %arg3: memref<9x512xf32, #tpu.memory_space<vmem>>, %arg4: memref<9x4x8xf32, #tpu.memory_space<vmem>>, %arg5: memref<4x1xf32, #tpu.memory_space<vmem>>, %arg6: memref<4x1xf32, #tpu.memory_space<vmem>>, %arg7: memref<9x4x4xf32, #tpu.memory_space<vmem>>, %arg8: memref<4x1xf32, #tpu.memory_space<vmem>>, %arg9: memref<4x1xf32, #tpu.memory_space<vmem>>, %arg10: memref<1x4xf32, #tpu.memory_space<vmem>>, %arg11: memref<1x1xf32, #tpu.memory_space<vmem>>, %arg12: memref<2x4x256xf32, #tpu.memory_space<vmem>>, %arg13: memref<2x1x256xf32, #tpu.memory_space<vmem>>) attributes {dimension_semantics = [], scalar_prefetch = 0 : i64, scratch_operands = 0 : i64, tpu.core_type = #tpu.core_type<tc>} {
    %c0 = arith.constant 0 : index
    %c0_0 = arith.constant 0 : index
    %c0_1 = arith.constant 0 : index
    %0 = vector.load %arg0[%c0, %c0_0, %c0_1] : memref<2x8x256xf32, #tpu.memory_space<vmem>>, vector<1x8x256xf32>
    %1 = vector.shape_cast %0 : vector<1x8x256xf32> to vector<8x256xf32>
    %c1 = arith.constant 1 : index
    %c0_2 = arith.constant 0 : index
    %c0_3 = arith.constant 0 : index
    %2 = vector.load %arg0[%c1, %c0_2, %c0_3] : memref<2x8x256xf32, #tpu.memory_space<vmem>>, vector<1x8x256xf32>
    %3 = vector.shape_cast %2 : vector<1x8x256xf32> to vector<8x256xf32>
    %4 = tpu.concatenate %1, %3 in 1 : vector<8x256xf32>, vector<8x256xf32> -> vector<8x512xf32>
    %cst = arith.constant 0.000000e+00 : f32
    %5 = vector.broadcast %cst : f32 to vector<4x512xf32>
    %c17_i32 = arith.constant 17 : i32
    %6 = tpu.dynamic_rotate %4 by %c17_i32 dim 1 : vector<8x512xf32>, i32 -> vector<8x512xf32>
    %c0_4 = arith.constant 0 : index
    %c0_5 = arith.constant 0 : index
    %c0_6 = arith.constant 0 : index
    %7 = vector.load %arg4[%c0_4, %c0_5, %c0_6] : memref<9x4x8xf32, #tpu.memory_space<vmem>>, vector<1x4x8xf32>
    %8 = vector.shape_cast %7 : vector<1x4x8xf32> to vector<4x8xf32>
    %9 = arith.truncf %8 : vector<4x8xf32> to vector<4x8xbf16>
    %10 = arith.truncf %6 : vector<8x512xf32> to vector<8x512xbf16>
    %cst_7 = arith.constant dense<0.000000e+00> : vector<4x512xf32>
    %11 = tpu.matmul %9, %10, %cst_7 {dimension_numbers = #tpu.dot_dimension_numbers<[1], [0], [0], [1], [0, 0, 1, 1], [], []>} : vector<4x8xbf16>, vector<8x512xbf16>, vector<4x512xf32> -> vector<4x512xf32>
    %c0_8 = arith.constant 0 : index
    %c0_9 = arith.constant 0 : index
    %12 = vector.load %arg3[%c0_8, %c0_9] : memref<9x512xf32, #tpu.memory_space<vmem>>, vector<1x512xf32>
    %13 = vector.broadcast %12 : vector<1x512xf32> to vector<4x512xf32>
    %14 = arith.mulf %11, %13 : vector<4x512xf32>
    %15 = arith.addf %5, %14 : vector<4x512xf32>
    %c16_i32 = arith.constant 16 : i32
    %16 = tpu.dynamic_rotate %4 by %c16_i32 dim 1 : vector<8x512xf32>, i32 -> vector<8x512xf32>
    %c1_10 = arith.constant 1 : index
    %c0_11 = arith.constant 0 : index
    %c0_12 = arith.constant 0 : index
    %17 = vector.load %arg4[%c1_10, %c0_11, %c0_12] : memref<9x4x8xf32, #tpu.memory_space<vmem>>, vector<1x4x8xf32>
    %18 = vector.shape_cast %17 : vector<1x4x8xf32> to vector<4x8xf32>
    %19 = arith.truncf %18 : vector<4x8xf32> to vector<4x8xbf16>
    %20 = arith.truncf %16 : vector<8x512xf32> to vector<8x512xbf16>
    %cst_13 = arith.constant dense<0.000000e+00> : vector<4x512xf32>
    %21 = tpu.matmul %19, %20, %cst_13 {dimension_numbers = #tpu.dot_dimension_numbers<[1], [0], [0], [1], [0, 0, 1, 1], [], []>} : vector<4x8xbf16>, vector<8x512xbf16>, vector<4x512xf32> -> vector<4x512xf32>
    %c1_14 = arith.constant 1 : index
    %c0_15 = arith.constant 0 : index
    %22 = vector.load %arg3[%c1_14, %c0_15] : memref<9x512xf32, #tpu.memory_space<vmem>>, vector<1x512xf32>
    %23 = vector.broadcast %22 : vector<1x512xf32> to vector<4x512xf32>
    %24 = arith.mulf %21, %23 : vector<4x512xf32>
    %25 = arith.addf %15, %24 : vector<4x512xf32>
    %c15_i32 = arith.constant 15 : i32
    %26 = tpu.dynamic_rotate %4 by %c15_i32 dim 1 : vector<8x512xf32>, i32 -> vector<8x512xf32>
    %c2 = arith.constant 2 : index
    %c0_16 = arith.constant 0 : index
    %c0_17 = arith.constant 0 : index
    %27 = vector.load %arg4[%c2, %c0_16, %c0_17] : memref<9x4x8xf32, #tpu.memory_space<vmem>>, vector<1x4x8xf32>
    %28 = vector.shape_cast %27 : vector<1x4x8xf32> to vector<4x8xf32>
    %29 = arith.truncf %28 : vector<4x8xf32> to vector<4x8xbf16>
    %30 = arith.truncf %26 : vector<8x512xf32> to vector<8x512xbf16>
    %cst_18 = arith.constant dense<0.000000e+00> : vector<4x512xf32>
    %31 = tpu.matmul %29, %30, %cst_18 {dimension_numbers = #tpu.dot_dimension_numbers<[1], [0], [0], [1], [0, 0, 1, 1], [], []>} : vector<4x8xbf16>, vector<8x512xbf16>, vector<4x512xf32> -> vector<4x512xf32>
    %c2_19 = arith.constant 2 : index
    %c0_20 = arith.constant 0 : index
    %32 = vector.load %arg3[%c2_19, %c0_20] : memref<9x512xf32, #tpu.memory_space<vmem>>, vector<1x512xf32>
    %33 = vector.broadcast %32 : vector<1x512xf32> to vector<4x512xf32>
    %34 = arith.mulf %31, %33 : vector<4x512xf32>
    %35 = arith.addf %25, %34 : vector<4x512xf32>
    %c1_i32 = arith.constant 1 : i32
    %36 = tpu.dynamic_rotate %4 by %c1_i32 dim 1 : vector<8x512xf32>, i32 -> vector<8x512xf32>
    %c3 = arith.constant 3 : index
    %c0_21 = arith.constant 0 : index
    %c0_22 = arith.constant 0 : index
    %37 = vector.load %arg4[%c3, %c0_21, %c0_22] : memref<9x4x8xf32, #tpu.memory_space<vmem>>, vector<1x4x8xf32>
    %38 = vector.shape_cast %37 : vector<1x4x8xf32> to vector<4x8xf32>
    %39 = arith.truncf %38 : vector<4x8xf32> to vector<4x8xbf16>
    %40 = arith.truncf %36 : vector<8x512xf32> to vector<8x512xbf16>
    %cst_23 = arith.constant dense<0.000000e+00> : vector<4x512xf32>
    %41 = tpu.matmul %39, %40, %cst_23 {dimension_numbers = #tpu.dot_dimension_numbers<[1], [0], [0], [1], [0, 0, 1, 1], [], []>} : vector<4x8xbf16>, vector<8x512xbf16>, vector<4x512xf32> -> vector<4x512xf32>
    %c3_24 = arith.constant 3 : index
    %c0_25 = arith.constant 0 : index
    %42 = vector.load %arg3[%c3_24, %c0_25] : memref<9x512xf32, #tpu.memory_space<vmem>>, vector<1x512xf32>
    %43 = vector.broadcast %42 : vector<1x512xf32> to vector<4x512xf32>
    %44 = arith.mulf %41, %43 : vector<4x512xf32>
    %45 = arith.addf %35, %44 : vector<4x512xf32>
    %c4 = arith.constant 4 : index
    %c0_26 = arith.constant 0 : index
    %c0_27 = arith.constant 0 : index
    %46 = vector.load %arg4[%c4, %c0_26, %c0_27] : memref<9x4x8xf32, #tpu.memory_space<vmem>>, vector<1x4x8xf32>
    %47 = vector.shape_cast %46 : vector<1x4x8xf32> to vector<4x8xf32>
    %48 = arith.truncf %47 : vector<4x8xf32> to vector<4x8xbf16>
    %49 = arith.truncf %4 : vector<8x512xf32> to vector<8x512xbf16>
    %cst_28 = arith.constant dense<0.000000e+00> : vector<4x512xf32>
    %50 = tpu.matmul %48, %49, %cst_28 {dimension_numbers = #tpu.dot_dimension_numbers<[1], [0], [0], [1], [0, 0, 1, 1], [], []>} : vector<4x8xbf16>, vector<8x512xbf16>, vector<4x512xf32> -> vector<4x512xf32>
    %51 = arith.addf %45, %50 : vector<4x512xf32>
    %c511_i32 = arith.constant 511 : i32
    %52 = tpu.dynamic_rotate %4 by %c511_i32 dim 1 : vector<8x512xf32>, i32 -> vector<8x512xf32>
    %c5 = arith.constant 5 : index
    %c0_29 = arith.constant 0 : index
    %c0_30 = arith.constant 0 : index
    %53 = vector.load %arg4[%c5, %c0_29, %c0_30] : memref<9x4x8xf32, #tpu.memory_space<vmem>>, vector<1x4x8xf32>
    %54 = vector.shape_cast %53 : vector<1x4x8xf32> to vector<4x8xf32>
    %55 = arith.truncf %54 : vector<4x8xf32> to vector<4x8xbf16>
    %56 = arith.truncf %52 : vector<8x512xf32> to vector<8x512xbf16>
    %cst_31 = arith.constant dense<0.000000e+00> : vector<4x512xf32>
    %57 = tpu.matmul %55, %56, %cst_31 {dimension_numbers = #tpu.dot_dimension_numbers<[1], [0], [0], [1], [0, 0, 1, 1], [], []>} : vector<4x8xbf16>, vector<8x512xbf16>, vector<4x512xf32> -> vector<4x512xf32>
    %c5_32 = arith.constant 5 : index
    %c0_33 = arith.constant 0 : index
    %58 = vector.load %arg3[%c5_32, %c0_33] : memref<9x512xf32, #tpu.memory_space<vmem>>, vector<1x512xf32>
    %59 = vector.broadcast %58 : vector<1x512xf32> to vector<4x512xf32>
    %60 = arith.mulf %57, %59 : vector<4x512xf32>
    %61 = arith.addf %51, %60 : vector<4x512xf32>
    %c497_i32 = arith.constant 497 : i32
    %62 = tpu.dynamic_rotate %4 by %c497_i32 dim 1 : vector<8x512xf32>, i32 -> vector<8x512xf32>
    %c6 = arith.constant 6 : index
    %c0_34 = arith.constant 0 : index
    %c0_35 = arith.constant 0 : index
    %63 = vector.load %arg4[%c6, %c0_34, %c0_35] : memref<9x4x8xf32, #tpu.memory_space<vmem>>, vector<1x4x8xf32>
    %64 = vector.shape_cast %63 : vector<1x4x8xf32> to vector<4x8xf32>
    %65 = arith.truncf %64 : vector<4x8xf32> to vector<4x8xbf16>
    %66 = arith.truncf %62 : vector<8x512xf32> to vector<8x512xbf16>
    %cst_36 = arith.constant dense<0.000000e+00> : vector<4x512xf32>
    %67 = tpu.matmul %65, %66, %cst_36 {dimension_numbers = #tpu.dot_dimension_numbers<[1], [0], [0], [1], [0, 0, 1, 1], [], []>} : vector<4x8xbf16>, vector<8x512xbf16>, vector<4x512xf32> -> vector<4x512xf32>
    %c6_37 = arith.constant 6 : index
    %c0_38 = arith.constant 0 : index
    %68 = vector.load %arg3[%c6_37, %c0_38] : memref<9x512xf32, #tpu.memory_space<vmem>>, vector<1x512xf32>
    %69 = vector.broadcast %68 : vector<1x512xf32> to vector<4x512xf32>
    %70 = arith.mulf %67, %69 : vector<4x512xf32>
    %71 = arith.addf %61, %70 : vector<4x512xf32>
    %c496_i32 = arith.constant 496 : i32
    %72 = tpu.dynamic_rotate %4 by %c496_i32 dim 1 : vector<8x512xf32>, i32 -> vector<8x512xf32>
    %c7 = arith.constant 7 : index
    %c0_39 = arith.constant 0 : index
    %c0_40 = arith.constant 0 : index
    %73 = vector.load %arg4[%c7, %c0_39, %c0_40] : memref<9x4x8xf32, #tpu.memory_space<vmem>>, vector<1x4x8xf32>
    %74 = vector.shape_cast %73 : vector<1x4x8xf32> to vector<4x8xf32>
    %75 = arith.truncf %74 : vector<4x8xf32> to vector<4x8xbf16>
    %76 = arith.truncf %72 : vector<8x512xf32> to vector<8x512xbf16>
    %cst_41 = arith.constant dense<0.000000e+00> : vector<4x512xf32>
    %77 = tpu.matmul %75, %76, %cst_41 {dimension_numbers = #tpu.dot_dimension_numbers<[1], [0], [0], [1], [0, 0, 1, 1], [], []>} : vector<4x8xbf16>, vector<8x512xbf16>, vector<4x512xf32> -> vector<4x512xf32>
    %c7_42 = arith.constant 7 : index
    %c0_43 = arith.constant 0 : index
    %78 = vector.load %arg3[%c7_42, %c0_43] : memref<9x512xf32, #tpu.memory_space<vmem>>, vector<1x512xf32>
    %79 = vector.broadcast %78 : vector<1x512xf32> to vector<4x512xf32>
    %80 = arith.mulf %77, %79 : vector<4x512xf32>
    %81 = arith.addf %71, %80 : vector<4x512xf32>
    %c495_i32 = arith.constant 495 : i32
    %82 = tpu.dynamic_rotate %4 by %c495_i32 dim 1 : vector<8x512xf32>, i32 -> vector<8x512xf32>
    %c8 = arith.constant 8 : index
    %c0_44 = arith.constant 0 : index
    %c0_45 = arith.constant 0 : index
    %83 = vector.load %arg4[%c8, %c0_44, %c0_45] : memref<9x4x8xf32, #tpu.memory_space<vmem>>, vector<1x4x8xf32>
    %84 = vector.shape_cast %83 : vector<1x4x8xf32> to vector<4x8xf32>
    %85 = arith.truncf %84 : vector<4x8xf32> to vector<4x8xbf16>
    %86 = arith.truncf %82 : vector<8x512xf32> to vector<8x512xbf16>
    %cst_46 = arith.constant dense<0.000000e+00> : vector<4x512xf32>
    %87 = tpu.matmul %85, %86, %cst_46 {dimension_numbers = #tpu.dot_dimension_numbers<[1], [0], [0], [1], [0, 0, 1, 1], [], []>} : vector<4x8xbf16>, vector<8x512xbf16>, vector<4x512xf32> -> vector<4x512xf32>
    %c8_47 = arith.constant 8 : index
    %c0_48 = arith.constant 0 : index
    %88 = vector.load %arg3[%c8_47, %c0_48] : memref<9x512xf32, #tpu.memory_space<vmem>>, vector<1x512xf32>
    %89 = vector.broadcast %88 : vector<1x512xf32> to vector<4x512xf32>
    %90 = arith.mulf %87, %89 : vector<4x512xf32>
    %91 = arith.addf %81, %90 : vector<4x512xf32>
    %c0_49 = arith.constant 0 : index
    %c0_50 = arith.constant 0 : index
    %92 = vector.load %arg5[%c0_49, %c0_50] : memref<4x1xf32, #tpu.memory_space<vmem>>, vector<4x1xf32>
    %c0_51 = arith.constant 0 : index
    %c0_52 = arith.constant 0 : index
    %93 = vector.load %arg6[%c0_51, %c0_52] : memref<4x1xf32, #tpu.memory_space<vmem>>, vector<4x1xf32>
    %cst_53 = arith.constant dense<0.000000e+00> : vector<4xf32>
    %94 = vector.multi_reduction <add>, %91, %cst_53 [1] : vector<4x512xf32> to vector<4xf32>
    %95 = vector.shape_cast %94 : vector<4xf32> to vector<4x1xf32>
    %cst_54 = arith.constant 0.001953125 : f32
    %96 = vector.broadcast %cst_54 : f32 to vector<4x1xf32>
    %97 = arith.mulf %95, %96 : vector<4x1xf32>
    %98 = arith.mulf %91, %91 : vector<4x512xf32>
    %cst_55 = arith.constant dense<0.000000e+00> : vector<4xf32>
    %99 = vector.multi_reduction <add>, %98, %cst_55 [1] : vector<4x512xf32> to vector<4xf32>
    %100 = vector.shape_cast %99 : vector<4xf32> to vector<4x1xf32>
    %cst_56 = arith.constant 0.001953125 : f32
    %101 = vector.broadcast %cst_56 : f32 to vector<4x1xf32>
    %102 = arith.mulf %100, %101 : vector<4x1xf32>
    %103 = arith.mulf %97, %97 : vector<4x1xf32>
    %104 = arith.subf %102, %103 : vector<4x1xf32>
    %cst_57 = arith.constant 0.000000e+00 : f32
    %105 = vector.broadcast %cst_57 : f32 to vector<4x1xf32>
    %106 = arith.maximumf %104, %105 : vector<4x1xf32>
    %cst_58 = arith.constant 9.99999974E-6 : f32
    %107 = vector.broadcast %cst_58 : f32 to vector<4x1xf32>
    %108 = arith.addf %106, %107 : vector<4x1xf32>
    %109 = math.rsqrt %108 : vector<4x1xf32>
    %110 = arith.mulf %92, %109 : vector<4x1xf32>
    %111 = vector.broadcast %110 : vector<4x1xf32> to vector<4x512xf32>
    %112 = arith.mulf %91, %111 : vector<4x512xf32>
    %113 = arith.mulf %97, %110 : vector<4x1xf32>
    %114 = arith.subf %93, %113 : vector<4x1xf32>
    %115 = vector.broadcast %114 : vector<4x1xf32> to vector<4x512xf32>
    %116 = arith.addf %112, %115 : vector<4x512xf32>
    %cst_59 = arith.constant 0.000000e+00 : f32
    %117 = vector.broadcast %cst_59 : f32 to vector<4x512xf32>
    %118 = arith.maximumf %116, %117 : vector<4x512xf32>
    %c0_60 = arith.constant 0 : index
    %c0_61 = arith.constant 0 : index
    %c0_62 = arith.constant 0 : index
    %119 = vector.load %arg1[%c0_60, %c0_61, %c0_62] : memref<2x4x64xf32, #tpu.memory_space<vmem>>, vector<1x4x64xf32>
    %120 = vector.shape_cast %119 : vector<1x4x64xf32> to vector<4x64xf32>
    %c0_63 = arith.constant 0 : index
    %c0_64 = arith.constant 0 : index
    %121 = vector.load %arg2[%c0_63, %c0_64] : memref<64x256xf32, #tpu.memory_space<vmem>>, vector<64x256xf32>
    %cst_65 = arith.constant dense<0.000000e+00> : vector<4x256xf32>
    %122 = tpu.matmul %120, %121, %cst_65 {dimension_numbers = #tpu.dot_dimension_numbers<[1], [0], [0], [1], [0, 0, 1, 1], [], []>} : vector<4x64xf32>, vector<64x256xf32>, vector<4x256xf32> -> vector<4x256xf32>
    %c1_66 = arith.constant 1 : index
    %c0_67 = arith.constant 0 : index
    %c0_68 = arith.constant 0 : index
    %123 = vector.load %arg1[%c1_66, %c0_67, %c0_68] : memref<2x4x64xf32, #tpu.memory_space<vmem>>, vector<1x4x64xf32>
    %124 = vector.shape_cast %123 : vector<1x4x64xf32> to vector<4x64xf32>
    %c0_69 = arith.constant 0 : index
    %c0_70 = arith.constant 0 : index
    %125 = vector.load %arg2[%c0_69, %c0_70] : memref<64x256xf32, #tpu.memory_space<vmem>>, vector<64x256xf32>
    %cst_71 = arith.constant dense<0.000000e+00> : vector<4x256xf32>
    %126 = tpu.matmul %124, %125, %cst_71 {dimension_numbers = #tpu.dot_dimension_numbers<[1], [0], [0], [1], [0, 0, 1, 1], [], []>} : vector<4x64xf32>, vector<64x256xf32>, vector<4x256xf32> -> vector<4x256xf32>
    %127 = tpu.concatenate %122, %126 in 1 : vector<4x256xf32>, vector<4x256xf32> -> vector<4x512xf32>
    %128 = arith.addf %118, %127 : vector<4x512xf32>
    %cst_72 = arith.constant 0.000000e+00 : f32
    %129 = vector.broadcast %cst_72 : f32 to vector<4x512xf32>
    %c17_i32_73 = arith.constant 17 : i32
    %130 = tpu.dynamic_rotate %128 by %c17_i32_73 dim 1 : vector<4x512xf32>, i32 -> vector<4x512xf32>
    %c0_74 = arith.constant 0 : index
    %c0_75 = arith.constant 0 : index
    %c0_76 = arith.constant 0 : index
    %131 = vector.load %arg7[%c0_74, %c0_75, %c0_76] : memref<9x4x4xf32, #tpu.memory_space<vmem>>, vector<1x4x4xf32>
    %132 = vector.shape_cast %131 : vector<1x4x4xf32> to vector<4x4xf32>
    %133 = arith.truncf %132 : vector<4x4xf32> to vector<4x4xbf16>
    %134 = arith.truncf %130 : vector<4x512xf32> to vector<4x512xbf16>
    %cst_77 = arith.constant dense<0.000000e+00> : vector<4x512xf32>
    %135 = tpu.matmul %133, %134, %cst_77 {dimension_numbers = #tpu.dot_dimension_numbers<[1], [0], [0], [1], [0, 0, 1, 1], [], []>} : vector<4x4xbf16>, vector<4x512xbf16>, vector<4x512xf32> -> vector<4x512xf32>
    %c0_78 = arith.constant 0 : index
    %c0_79 = arith.constant 0 : index
    %136 = vector.load %arg3[%c0_78, %c0_79] : memref<9x512xf32, #tpu.memory_space<vmem>>, vector<1x512xf32>
    %137 = vector.broadcast %136 : vector<1x512xf32> to vector<4x512xf32>
    %138 = arith.mulf %135, %137 : vector<4x512xf32>
    %139 = arith.addf %129, %138 : vector<4x512xf32>
    %c16_i32_80 = arith.constant 16 : i32
    %140 = tpu.dynamic_rotate %128 by %c16_i32_80 dim 1 : vector<4x512xf32>, i32 -> vector<4x512xf32>
    %c1_81 = arith.constant 1 : index
    %c0_82 = arith.constant 0 : index
    %c0_83 = arith.constant 0 : index
    %141 = vector.load %arg7[%c1_81, %c0_82, %c0_83] : memref<9x4x4xf32, #tpu.memory_space<vmem>>, vector<1x4x4xf32>
    %142 = vector.shape_cast %141 : vector<1x4x4xf32> to vector<4x4xf32>
    %143 = arith.truncf %142 : vector<4x4xf32> to vector<4x4xbf16>
    %144 = arith.truncf %140 : vector<4x512xf32> to vector<4x512xbf16>
    %cst_84 = arith.constant dense<0.000000e+00> : vector<4x512xf32>
    %145 = tpu.matmul %143, %144, %cst_84 {dimension_numbers = #tpu.dot_dimension_numbers<[1], [0], [0], [1], [0, 0, 1, 1], [], []>} : vector<4x4xbf16>, vector<4x512xbf16>, vector<4x512xf32> -> vector<4x512xf32>
    %c1_85 = arith.constant 1 : index
    %c0_86 = arith.constant 0 : index
    %146 = vector.load %arg3[%c1_85, %c0_86] : memref<9x512xf32, #tpu.memory_space<vmem>>, vector<1x512xf32>
    %147 = vector.broadcast %146 : vector<1x512xf32> to vector<4x512xf32>
    %148 = arith.mulf %145, %147 : vector<4x512xf32>
    %149 = arith.addf %139, %148 : vector<4x512xf32>
    %c15_i32_87 = arith.constant 15 : i32
    %150 = tpu.dynamic_rotate %128 by %c15_i32_87 dim 1 : vector<4x512xf32>, i32 -> vector<4x512xf32>
    %c2_88 = arith.constant 2 : index
    %c0_89 = arith.constant 0 : index
    %c0_90 = arith.constant 0 : index
    %151 = vector.load %arg7[%c2_88, %c0_89, %c0_90] : memref<9x4x4xf32, #tpu.memory_space<vmem>>, vector<1x4x4xf32>
    %152 = vector.shape_cast %151 : vector<1x4x4xf32> to vector<4x4xf32>
    %153 = arith.truncf %152 : vector<4x4xf32> to vector<4x4xbf16>
    %154 = arith.truncf %150 : vector<4x512xf32> to vector<4x512xbf16>
    %cst_91 = arith.constant dense<0.000000e+00> : vector<4x512xf32>
    %155 = tpu.matmul %153, %154, %cst_91 {dimension_numbers = #tpu.dot_dimension_numbers<[1], [0], [0], [1], [0, 0, 1, 1], [], []>} : vector<4x4xbf16>, vector<4x512xbf16>, vector<4x512xf32> -> vector<4x512xf32>
    %c2_92 = arith.constant 2 : index
    %c0_93 = arith.constant 0 : index
    %156 = vector.load %arg3[%c2_92, %c0_93] : memref<9x512xf32, #tpu.memory_space<vmem>>, vector<1x512xf32>
    %157 = vector.broadcast %156 : vector<1x512xf32> to vector<4x512xf32>
    %158 = arith.mulf %155, %157 : vector<4x512xf32>
    %159 = arith.addf %149, %158 : vector<4x512xf32>
    %c1_i32_94 = arith.constant 1 : i32
    %160 = tpu.dynamic_rotate %128 by %c1_i32_94 dim 1 : vector<4x512xf32>, i32 -> vector<4x512xf32>
    %c3_95 = arith.constant 3 : index
    %c0_96 = arith.constant 0 : index
    %c0_97 = arith.constant 0 : index
    %161 = vector.load %arg7[%c3_95, %c0_96, %c0_97] : memref<9x4x4xf32, #tpu.memory_space<vmem>>, vector<1x4x4xf32>
    %162 = vector.shape_cast %161 : vector<1x4x4xf32> to vector<4x4xf32>
    %163 = arith.truncf %162 : vector<4x4xf32> to vector<4x4xbf16>
    %164 = arith.truncf %160 : vector<4x512xf32> to vector<4x512xbf16>
    %cst_98 = arith.constant dense<0.000000e+00> : vector<4x512xf32>
    %165 = tpu.matmul %163, %164, %cst_98 {dimension_numbers = #tpu.dot_dimension_numbers<[1], [0], [0], [1], [0, 0, 1, 1], [], []>} : vector<4x4xbf16>, vector<4x512xbf16>, vector<4x512xf32> -> vector<4x512xf32>
    %c3_99 = arith.constant 3 : index
    %c0_100 = arith.constant 0 : index
    %166 = vector.load %arg3[%c3_99, %c0_100] : memref<9x512xf32, #tpu.memory_space<vmem>>, vector<1x512xf32>
    %167 = vector.broadcast %166 : vector<1x512xf32> to vector<4x512xf32>
    %168 = arith.mulf %165, %167 : vector<4x512xf32>
    %169 = arith.addf %159, %168 : vector<4x512xf32>
    %c4_101 = arith.constant 4 : index
    %c0_102 = arith.constant 0 : index
    %c0_103 = arith.constant 0 : index
    %170 = vector.load %arg7[%c4_101, %c0_102, %c0_103] : memref<9x4x4xf32, #tpu.memory_space<vmem>>, vector<1x4x4xf32>
    %171 = vector.shape_cast %170 : vector<1x4x4xf32> to vector<4x4xf32>
    %172 = arith.truncf %171 : vector<4x4xf32> to vector<4x4xbf16>
    %173 = arith.truncf %128 : vector<4x512xf32> to vector<4x512xbf16>
    %cst_104 = arith.constant dense<0.000000e+00> : vector<4x512xf32>
    %174 = tpu.matmul %172, %173, %cst_104 {dimension_numbers = #tpu.dot_dimension_numbers<[1], [0], [0], [1], [0, 0, 1, 1], [], []>} : vector<4x4xbf16>, vector<4x512xbf16>, vector<4x512xf32> -> vector<4x512xf32>
    %175 = arith.addf %169, %174 : vector<4x512xf32>
    %c511_i32_105 = arith.constant 511 : i32
    %176 = tpu.dynamic_rotate %128 by %c511_i32_105 dim 1 : vector<4x512xf32>, i32 -> vector<4x512xf32>
    %c5_106 = arith.constant 5 : index
    %c0_107 = arith.constant 0 : index
    %c0_108 = arith.constant 0 : index
    %177 = vector.load %arg7[%c5_106, %c0_107, %c0_108] : memref<9x4x4xf32, #tpu.memory_space<vmem>>, vector<1x4x4xf32>
    %178 = vector.shape_cast %177 : vector<1x4x4xf32> to vector<4x4xf32>
    %179 = arith.truncf %178 : vector<4x4xf32> to vector<4x4xbf16>
    %180 = arith.truncf %176 : vector<4x512xf32> to vector<4x512xbf16>
    %cst_109 = arith.constant dense<0.000000e+00> : vector<4x512xf32>
    %181 = tpu.matmul %179, %180, %cst_109 {dimension_numbers = #tpu.dot_dimension_numbers<[1], [0], [0], [1], [0, 0, 1, 1], [], []>} : vector<4x4xbf16>, vector<4x512xbf16>, vector<4x512xf32> -> vector<4x512xf32>
    %c5_110 = arith.constant 5 : index
    %c0_111 = arith.constant 0 : index
    %182 = vector.load %arg3[%c5_110, %c0_111] : memref<9x512xf32, #tpu.memory_space<vmem>>, vector<1x512xf32>
    %183 = vector.broadcast %182 : vector<1x512xf32> to vector<4x512xf32>
    %184 = arith.mulf %181, %183 : vector<4x512xf32>
    %185 = arith.addf %175, %184 : vector<4x512xf32>
    %c497_i32_112 = arith.constant 497 : i32
    %186 = tpu.dynamic_rotate %128 by %c497_i32_112 dim 1 : vector<4x512xf32>, i32 -> vector<4x512xf32>
    %c6_113 = arith.constant 6 : index
    %c0_114 = arith.constant 0 : index
    %c0_115 = arith.constant 0 : index
    %187 = vector.load %arg7[%c6_113, %c0_114, %c0_115] : memref<9x4x4xf32, #tpu.memory_space<vmem>>, vector<1x4x4xf32>
    %188 = vector.shape_cast %187 : vector<1x4x4xf32> to vector<4x4xf32>
    %189 = arith.truncf %188 : vector<4x4xf32> to vector<4x4xbf16>
    %190 = arith.truncf %186 : vector<4x512xf32> to vector<4x512xbf16>
    %cst_116 = arith.constant dense<0.000000e+00> : vector<4x512xf32>
    %191 = tpu.matmul %189, %190, %cst_116 {dimension_numbers = #tpu.dot_dimension_numbers<[1], [0], [0], [1], [0, 0, 1, 1], [], []>} : vector<4x4xbf16>, vector<4x512xbf16>, vector<4x512xf32> -> vector<4x512xf32>
    %c6_117 = arith.constant 6 : index
    %c0_118 = arith.constant 0 : index
    %192 = vector.load %arg3[%c6_117, %c0_118] : memref<9x512xf32, #tpu.memory_space<vmem>>, vector<1x512xf32>
    %193 = vector.broadcast %192 : vector<1x512xf32> to vector<4x512xf32>
    %194 = arith.mulf %191, %193 : vector<4x512xf32>
    %195 = arith.addf %185, %194 : vector<4x512xf32>
    %c496_i32_119 = arith.constant 496 : i32
    %196 = tpu.dynamic_rotate %128 by %c496_i32_119 dim 1 : vector<4x512xf32>, i32 -> vector<4x512xf32>
    %c7_120 = arith.constant 7 : index
    %c0_121 = arith.constant 0 : index
    %c0_122 = arith.constant 0 : index
    %197 = vector.load %arg7[%c7_120, %c0_121, %c0_122] : memref<9x4x4xf32, #tpu.memory_space<vmem>>, vector<1x4x4xf32>
    %198 = vector.shape_cast %197 : vector<1x4x4xf32> to vector<4x4xf32>
    %199 = arith.truncf %198 : vector<4x4xf32> to vector<4x4xbf16>
    %200 = arith.truncf %196 : vector<4x512xf32> to vector<4x512xbf16>
    %cst_123 = arith.constant dense<0.000000e+00> : vector<4x512xf32>
    %201 = tpu.matmul %199, %200, %cst_123 {dimension_numbers = #tpu.dot_dimension_numbers<[1], [0], [0], [1], [0, 0, 1, 1], [], []>} : vector<4x4xbf16>, vector<4x512xbf16>, vector<4x512xf32> -> vector<4x512xf32>
    %c7_124 = arith.constant 7 : index
    %c0_125 = arith.constant 0 : index
    %202 = vector.load %arg3[%c7_124, %c0_125] : memref<9x512xf32, #tpu.memory_space<vmem>>, vector<1x512xf32>
    %203 = vector.broadcast %202 : vector<1x512xf32> to vector<4x512xf32>
    %204 = arith.mulf %201, %203 : vector<4x512xf32>
    %205 = arith.addf %195, %204 : vector<4x512xf32>
    %c495_i32_126 = arith.constant 495 : i32
    %206 = tpu.dynamic_rotate %128 by %c495_i32_126 dim 1 : vector<4x512xf32>, i32 -> vector<4x512xf32>
    %c8_127 = arith.constant 8 : index
    %c0_128 = arith.constant 0 : index
    %c0_129 = arith.constant 0 : index
    %207 = vector.load %arg7[%c8_127, %c0_128, %c0_129] : memref<9x4x4xf32, #tpu.memory_space<vmem>>, vector<1x4x4xf32>
    %208 = vector.shape_cast %207 : vector<1x4x4xf32> to vector<4x4xf32>
    %209 = arith.truncf %208 : vector<4x4xf32> to vector<4x4xbf16>
    %210 = arith.truncf %206 : vector<4x512xf32> to vector<4x512xbf16>
    %cst_130 = arith.constant dense<0.000000e+00> : vector<4x512xf32>
    %211 = tpu.matmul %209, %210, %cst_130 {dimension_numbers = #tpu.dot_dimension_numbers<[1], [0], [0], [1], [0, 0, 1, 1], [], []>} : vector<4x4xbf16>, vector<4x512xbf16>, vector<4x512xf32> -> vector<4x512xf32>
    %c8_131 = arith.constant 8 : index
    %c0_132 = arith.constant 0 : index
    %212 = vector.load %arg3[%c8_131, %c0_132] : memref<9x512xf32, #tpu.memory_space<vmem>>, vector<1x512xf32>
    %213 = vector.broadcast %212 : vector<1x512xf32> to vector<4x512xf32>
    %214 = arith.mulf %211, %213 : vector<4x512xf32>
    %215 = arith.addf %205, %214 : vector<4x512xf32>
    %c0_133 = arith.constant 0 : index
    %c0_134 = arith.constant 0 : index
    %216 = vector.load %arg8[%c0_133, %c0_134] : memref<4x1xf32, #tpu.memory_space<vmem>>, vector<4x1xf32>
    %c0_135 = arith.constant 0 : index
    %c0_136 = arith.constant 0 : index
    %217 = vector.load %arg9[%c0_135, %c0_136] : memref<4x1xf32, #tpu.memory_space<vmem>>, vector<4x1xf32>
    %cst_137 = arith.constant dense<0.000000e+00> : vector<4xf32>
    %218 = vector.multi_reduction <add>, %215, %cst_137 [1] : vector<4x512xf32> to vector<4xf32>
    %219 = vector.shape_cast %218 : vector<4xf32> to vector<4x1xf32>
    %cst_138 = arith.constant 0.001953125 : f32
    %220 = vector.broadcast %cst_138 : f32 to vector<4x1xf32>
    %221 = arith.mulf %219, %220 : vector<4x1xf32>
    %222 = arith.mulf %215, %215 : vector<4x512xf32>
    %cst_139 = arith.constant dense<0.000000e+00> : vector<4xf32>
    %223 = vector.multi_reduction <add>, %222, %cst_139 [1] : vector<4x512xf32> to vector<4xf32>
    %224 = vector.shape_cast %223 : vector<4xf32> to vector<4x1xf32>
    %cst_140 = arith.constant 0.001953125 : f32
    %225 = vector.broadcast %cst_140 : f32 to vector<4x1xf32>
    %226 = arith.mulf %224, %225 : vector<4x1xf32>
    %227 = arith.mulf %221, %221 : vector<4x1xf32>
    %228 = arith.subf %226, %227 : vector<4x1xf32>
    %cst_141 = arith.constant 0.000000e+00 : f32
    %229 = vector.broadcast %cst_141 : f32 to vector<4x1xf32>
    %230 = arith.maximumf %228, %229 : vector<4x1xf32>
    %cst_142 = arith.constant 9.99999974E-6 : f32
    %231 = vector.broadcast %cst_142 : f32 to vector<4x1xf32>
    %232 = arith.addf %230, %231 : vector<4x1xf32>
    %233 = math.rsqrt %232 : vector<4x1xf32>
    %234 = arith.mulf %216, %233 : vector<4x1xf32>
    %235 = vector.broadcast %234 : vector<4x1xf32> to vector<4x512xf32>
    %236 = arith.mulf %215, %235 : vector<4x512xf32>
    %237 = arith.mulf %221, %234 : vector<4x1xf32>
    %238 = arith.subf %217, %237 : vector<4x1xf32>
    %239 = vector.broadcast %238 : vector<4x1xf32> to vector<4x512xf32>
    %240 = arith.addf %236, %239 : vector<4x512xf32>
    %cst_143 = arith.constant 0.000000e+00 : f32
    %241 = vector.broadcast %cst_143 : f32 to vector<4x512xf32>
    %242 = arith.maximumf %240, %241 : vector<4x512xf32>
    %c0_144 = arith.constant 0 : index
    %c0_145 = arith.constant 0 : index
    %243 = vector.load %arg10[%c0_144, %c0_145] : memref<1x4xf32, #tpu.memory_space<vmem>>, vector<1x4xf32>
    %cst_146 = arith.constant dense<0.000000e+00> : vector<1x512xf32>
    %244 = tpu.matmul %243, %242, %cst_146 {dimension_numbers = #tpu.dot_dimension_numbers<[1], [0], [0], [1], [0, 0, 1, 1], [], []>} : vector<1x4xf32>, vector<4x512xf32>, vector<1x512xf32> -> vector<1x512xf32>
    %c0_147 = arith.constant 0 : index
    %c0_148 = arith.constant 0 : index
    %245 = vector.load %arg11[%c0_147, %c0_148] : memref<1x1xf32, #tpu.memory_space<vmem>>, vector<1x1xf32>
    %246 = vector.broadcast %245 : vector<1x1xf32> to vector<1x512xf32>
    %247 = arith.addf %244, %246 : vector<1x512xf32>
    %248 = vector.extract_strided_slice %242 {offsets = [0, 0], sizes = [4, 256], strides = [1, 1]} : vector<4x512xf32> to vector<4x256xf32>
    %c0_149 = arith.constant 0 : index
    %c0_150 = arith.constant 0 : index
    %c0_151 = arith.constant 0 : index
    %249 = vector.load %arg12[%c0_149, %c0_150, %c0_151] : memref<2x4x256xf32, #tpu.memory_space<vmem>>, vector<1x4x256xf32>
    %250 = vector.shape_cast %249 : vector<1x4x256xf32> to vector<4x256xf32>
    %251 = vector.shape_cast %248 : vector<4x256xf32> to vector<1x4x256xf32>
    tpu.vector_store %arg12[%c0_149, %c0_150, %c0_151], %251 {strides = array<i32>} : memref<2x4x256xf32, #tpu.memory_space<vmem>>, vector<1x4x256xf32>,
    %252 = vector.extract_strided_slice %247 {offsets = [0, 0], sizes = [1, 256], strides = [1, 1]} : vector<1x512xf32> to vector<1x256xf32>
    %c0_152 = arith.constant 0 : index
    %c0_153 = arith.constant 0 : index
    %c0_154 = arith.constant 0 : index
    %253 = vector.load %arg13[%c0_152, %c0_153, %c0_154] : memref<2x1x256xf32, #tpu.memory_space<vmem>>, vector<1x1x256xf32>
    %254 = vector.shape_cast %253 : vector<1x1x256xf32> to vector<1x256xf32>
    %255 = vector.shape_cast %252 : vector<1x256xf32> to vector<1x1x256xf32>
    tpu.vector_store %arg13[%c0_152, %c0_153, %c0_154], %255 {strides = array<i32>} : memref<2x1x256xf32, #tpu.memory_space<vmem>>, vector<1x1x256xf32>,
    %256 = vector.extract_strided_slice %242 {offsets = [0, 256], sizes = [4, 256], strides = [1, 1]} : vector<4x512xf32> to vector<4x256xf32>
    %c1_155 = arith.constant 1 : index
    %c0_156 = arith.constant 0 : index
    %c0_157 = arith.constant 0 : index
    %257 = vector.load %arg12[%c1_155, %c0_156, %c0_157] : memref<2x4x256xf32, #tpu.memory_space<vmem>>, vector<1x4x256xf32>
    %258 = vector.shape_cast %257 : vector<1x4x256xf32> to vector<4x256xf32>
    %259 = vector.shape_cast %256 : vector<4x256xf32> to vector<1x4x256xf32>
    tpu.vector_store %arg12[%c1_155, %c0_156, %c0_157], %259 {strides = array<i32>} : memref<2x4x256xf32, #tpu.memory_space<vmem>>, vector<1x4x256xf32>,
    %260 = vector.extract_strided_slice %247 {offsets = [0, 256], sizes = [1, 256], strides = [1, 1]} : vector<1x512xf32> to vector<1x256xf32>
    %c1_158 = arith.constant 1 : index
    %c0_159 = arith.constant 0 : index
    %c0_160 = arith.constant 0 : index
    %261 = vector.load %arg13[%c1_158, %c0_159, %c0_160] : memref<2x1x256xf32, #tpu.memory_space<vmem>>, vector<1x1x256xf32>
    %262 = vector.shape_cast %261 : vector<1x1x256xf32> to vector<1x256xf32>
    %263 = vector.shape_cast %260 : vector<1x256xf32> to vector<1x1x256xf32>
    tpu.vector_store %arg13[%c1_158, %c0_159, %c0_160], %263 {strides = array<i32>} : memref<2x1x256xf32, #tpu.memory_space<vmem>>, vector<1x1x256xf32>,
    return
  }
}

</mosaic_0001>

<llo_original>
// kernel: decoder_forward.1
$region0: #{decoder_forward.1}
  #allocation0 [shape = 'u32[]', space=smem, size = 0x4, offset = 0x4, fixed_abs, tag = 'smem constant byte address 0x4 - core index']
  #allocation1 [shape = 'u32[72,128]{1,0:T(1,128)}', space=vmem, size = 0x9000, scoped, tag = 'internal scratch']
  #allocation2 [shape = 'f32[1,1]{1,0:T(1,128)S(1)}', space=vmem, size = 0x200, scoped, tag = 'scoped memory for decoder_forward.1']
  %s0 = inlined_call_operand.vmem [shape: f32[2,8,256], index: 0, kind: input, shape index: {}]
  %s1 = inlined_call_operand.vmem [shape: f32[2,4,64], index: 1, kind: input, shape index: {}]
  %s2 = inlined_call_operand.vmem [shape: f32[64,256], index: 2, kind: input, shape index: {}]
  %s3 = inlined_call_operand.vmem [shape: f32[9,512], index: 3, kind: input, shape index: {}]
  %s4 = inlined_call_operand.vmem [shape: f32[9,4,8], index: 4, kind: input, shape index: {}]
  %s5 = inlined_call_operand.vmem [shape: f32[4,1], index: 5, kind: input, shape index: {}]
  %s6 = inlined_call_operand.vmem [shape: f32[4,1], index: 6, kind: input, shape index: {}]
  %s7 = inlined_call_operand.vmem [shape: f32[9,4,4], index: 7, kind: input, shape index: {}]
  %s8 = inlined_call_operand.vmem [shape: f32[4,1], index: 8, kind: input, shape index: {}]
  %s9 = inlined_call_operand.vmem [shape: f32[4,1], index: 9, kind: input, shape index: {}]
  %s10 = inlined_call_operand.vmem [shape: f32[1,4], index: 10, kind: input, shape index: {}]
  %s11 = inlined_call_operand.<no memory space> [shape: f32[1,1], index: 11, kind: input, shape index: {}]
  %s12 = inlined_call_operand.vmem [shape: f32[2,4,256], index: 12, kind: output, shape index: {0}]
  %s13 = inlined_call_operand.vmem [shape: f32[2,1,256], index: 13, kind: output, shape index: {1}]
  %14 = xla_tuple %s12, %s13
  %s15 = sld [smem:[#allocation0]]
  $region66: #{decoder_forward.1} parent=0
    _
  %s17 = ssub.s32 1, %s15
  %s18 = scalar_select 0, %s17, %s15
  %v19 = vstv %s11
  %20 = vst [vmem:[#allocation2] sm:$0x1] %v19
  // Predicated region
  $region2: #{decoder_forward.1} parent=0 // pred_check
    _
  $region3: #{decoder_forward.1} parent=0 // pred_check_branch
    %22 = sbr.rel (0) target = $region5
  $region4: #{decoder_forward.1} parent=0 // pred_region
    _
  $region5: #{decoder_forward.1} parent=0 // pred_fallthru
    _
  // Predicated region
  $region6: #{decoder_forward.1} parent=0 // pred_check
    _
  $region7: #{decoder_forward.1} parent=0 // pred_check_branch
    %24 = sbr.rel (0) target = $region9
  $region8: #{decoder_forward.1} parent=0 // pred_region
    _
  $region9: #{decoder_forward.1} parent=0 // pred_fallthru
    _
  // Predicated region
  $region10: #{decoder_forward.1} parent=0 // pred_check
    _
  $region11: #{decoder_forward.1} parent=0 // pred_check_branch
    %26 = sbr.rel (0) target = $region13
  $region12: #{decoder_forward.1} parent=0 // pred_region
    _
  $region13: #{decoder_forward.1} parent=0 // pred_fallthru
    _
  // Predicated region
  $region14: #{decoder_forward.1} parent=0 // pred_check
    _
  $region15: #{decoder_forward.1} parent=0 // pred_check_branch
    %28 = sbr.rel (0) target = $region17
  $region16: #{decoder_forward.1} parent=0 // pred_region
    _
  $region17: #{decoder_forward.1} parent=0 // pred_fallthru
    _
  // Predicated region
  $region18: #{decoder_forward.1} parent=0 // pred_check
    _
  $region19: #{decoder_forward.1} parent=0 // pred_check_branch
    %30 = sbr.rel (0) target = $region21
  $region20: #{decoder_forward.1} parent=0 // pred_region
    _
  $region21: #{decoder_forward.1} parent=0 // pred_fallthru
    _
  // Predicated region
  $region22: #{decoder_forward.1} parent=0 // pred_check
    _
  $region23: #{decoder_forward.1} parent=0 // pred_check_branch
    %32 = sbr.rel (0) target = $region25
  $region24: #{decoder_forward.1} parent=0 // pred_region
    _
  $region25: #{decoder_forward.1} parent=0 // pred_fallthru
    _
  // Predicated region
  $region26: #{decoder_forward.1} parent=0 // pred_check
    _
  $region27: #{decoder_forward.1} parent=0 // pred_check_branch
    %34 = sbr.rel (0) target = $region29
  $region28: #{decoder_forward.1} parent=0 // pred_region
    _
  $region29: #{decoder_forward.1} parent=0 // pred_fallthru
    _
  // Predicated region
  $region30: #{decoder_forward.1} parent=0 // pred_check
    _
  $region31: #{decoder_forward.1} parent=0 // pred_check_branch
    %36 = sbr.rel (0) target = $region33
  $region32: #{decoder_forward.1} parent=0 // pred_region
    _
  $region33: #{decoder_forward.1} parent=0 // pred_fallthru
    _
  // Predicated region
  $region34: #{decoder_forward.1} parent=0 // pred_check
    _
  $region35: #{decoder_forward.1} parent=0 // pred_check_branch
    %38 = sbr.rel (0) target = $region37
  $region36: #{decoder_forward.1} parent=0 // pred_region
    _
  $region37: #{decoder_forward.1} parent=0 // pred_fallthru
    _
  // Predicated region
  $region38: #{decoder_forward.1} parent=0 // pred_check
    _
  $region39: #{decoder_forward.1} parent=0 // pred_check_branch
    %40 = sbr.rel (0) target = $region41
  $region40: #{decoder_forward.1} parent=0 // pred_region
    _
  $region41: #{decoder_forward.1} parent=0 // pred_fallthru
    _
  // Predicated region
  $region42: #{decoder_forward.1} parent=0 // pred_check
    _
  $region43: #{decoder_forward.1} parent=0 // pred_check_branch
    %42 = sbr.rel (0) target = $region45
  $region44: #{decoder_forward.1} parent=0 // pred_region
    _
  $region45: #{decoder_forward.1} parent=0 // pred_fallthru
    _
  // Predicated region
  $region46: #{decoder_forward.1} parent=0 // pred_check
    _
  $region47: #{decoder_forward.1} parent=0 // pred_check_branch
    %44 = sbr.rel (0) target = $region49
  $region48: #{decoder_forward.1} parent=0 // pred_region
    _
  $region49: #{decoder_forward.1} parent=0 // pred_fallthru
    _
  %v46 = vld [vmem:[%s0] sm:$0xff]
  %v47 = vld [vmem:[%s0 + $0x8] sm:$0xff]
  %s48 = scalar_lea.vmem %s0, 16
  %v49 = vld [vmem:[%s48] sm:$0xff]
  %v50 = vld [vmem:[%s48 + $0x8] sm:$0xff]
  %51 = vrot.lane.b32.xlu0 %v46, 17
  %v52 = vpop.permute.xlu0 %51
  %53 = vrot.lane.b32.xlu0 %v47, 17
  %v54 = vpop.permute.xlu0 %53
  %55 = vrot.lane.b32.xlu0 %v49, 17
  %v56 = vpop.permute.xlu0 %55
  %57 = vrot.lane.b32.xlu0 %v50, 17
  %v58 = vpop.permute.xlu0 %57
  %v59 = vlaneseq
  %v60 = vand.u32 %v59, 127
  %vm61 = vcmp.lt.s32.totalorder %v60, 17
  %v62 = vsel %vm61, %v56, %v58
  %v63 = vsel %vm61, %v54, %v56
  %v64 = vsel %vm61, %v52, %v54
  %v65 = vsel %vm61, %v58, %v52
  %v66 = vld [vmem:[%s4] sm:$0xf]
  %v67 = vpack.c.bf16 %v66, %v66
  %v68 = vpack.c.bf16 %v65, %v65
  %v69 = vpack.c.bf16 %v64, %v64
  %v70 = vpack.c.bf16 %v63, %v63
  %v71 = vpack.c.bf16 %v62, %v62
  %vm72 = vcmask 64512
  %v74 = vsel %vm72, %v67, 0
  %vm76 = vcmask 1043456
  %v78 = vsel %vm76, %v68, 0
  %v81 = vsel %vm76, %v69, 0
  %v84 = vsel %vm76, %v70, 0
  %v87 = vsel %vm76, %v71, 0
  %89 = vmatpush.bf16.msra.mxu0 0
  %90 = vmatpush.bf16.msra.mxu0 0
  %91 = vmatpush.bf16.msra.mxu0 0
  %92 = vmatpush.bf16.msra.mxu0 0
  %93 = vmatpush.bf16.msra.mxu0 0
  %94 = vmatpush.bf16.msra.mxu0 0
  %95 = vmatpush.bf16.msra.mxu0 0
  %96 = vmatpush.bf16.msra.mxu0 %v78
  %97 = vmatmul.bf16.gmra.mxu0 %v74
  %v98 = vpop.f32.mrf.mxu0
  %v99 = vadd.f32 0.0, %v98
  %v100 = vpop.f32.mrf.mxu0
  %101 = vdwg.mxu0
  %102 = vmatpush.bf16.msra.mxu0 0
  %103 = vmatpush.bf16.msra.mxu0 0
  %104 = vmatpush.bf16.msra.mxu0 0
  %105 = vmatpush.bf16.msra.mxu0 0
  %106 = vmatpush.bf16.msra.mxu0 0
  %107 = vmatpush.bf16.msra.mxu0 0
  %108 = vmatpush.bf16.msra.mxu0 0
  %109 = vmatpush.bf16.msra.mxu0 %v81
  %110 = vmatmul.bf16.gmra.mxu0 %v74
  %v111 = vpop.f32.mrf.mxu0
  %v112 = vadd.f32 0.0, %v111
  %v113 = vpop.f32.mrf.mxu0
  %114 = vdwg.mxu0
  %115 = vmatpush.bf16.msra.mxu0 0
  %116 = vmatpush.bf16.msra.mxu0 0
  %117 = vmatpush.bf16.msra.mxu0 0
  %118 = vmatpush.bf16.msra.mxu0 0
  %119 = vmatpush.bf16.msra.mxu0 0
  %120 = vmatpush.bf16.msra.mxu0 0
  %121 = vmatpush.bf16.msra.mxu0 0
  %122 = vmatpush.bf16.msra.mxu0 %v84
  %123 = vmatmul.bf16.gmra.mxu0 %v74
  %v124 = vpop.f32.mrf.mxu0
  %v125 = vadd.f32 0.0, %v124
  %v126 = vpop.f32.mrf.mxu0
  %127 = vdwg.mxu0
  %128 = vmatpush.bf16.msra.mxu0 0
  %129 = vmatpush.bf16.msra.mxu0 0
  %130 = vmatpush.bf16.msra.mxu0 0
  %131 = vmatpush.bf16.msra.mxu0 0
  %132 = vmatpush.bf16.msra.mxu0 0
  %133 = vmatpush.bf16.msra.mxu0 0
  %134 = vmatpush.bf16.msra.mxu0 0
  %135 = vmatpush.bf16.msra.mxu0 %v87
  %136 = vmatmul.bf16.gmra.mxu0 %v74
  %v137 = vpop.f32.mrf.mxu0
  %v138 = vadd.f32 0.0, %v137
  %v139 = vpop.f32.mrf.mxu0
  %140 = vdwg.mxu0
  %v141 = vld [vmem:[%s3] ss:$8 sm:$0xf]
  %v143 = vperm.slane %v141, 0
  %v144 = vperm.slane %v141, 1
  %v145 = vperm.slane %v141, 2
  %v146 = vperm.slane %v141, 3
  %v151 = vmul.f32 %v99, %v143
  %v152 = vmul.f32 %v112, %v144
  %v153 = vmul.f32 %v125, %v145
  %v154 = vmul.f32 %v138, %v146
  %v155 = vadd.f32 %v151, 0.0
  %v156 = vadd.f32 %v152, 0.0
  %v157 = vadd.f32 %v153, 0.0
  %v158 = vadd.f32 %v154, 0.0
  %159 = vrot.lane.b32.xlu0 %v46, 16
  %v160 = vpop.permute.xlu0 %159
  %161 = vrot.lane.b32.xlu0 %v47, 16
  %v162 = vpop.permute.xlu0 %161
  %163 = vrot.lane.b32.xlu0 %v49, 16
  %v164 = vpop.permute.xlu0 %163
  %165 = vrot.lane.b32.xlu0 %v50, 16
  %v166 = vpop.permute.xlu0 %165
  %vm167 = vcmp.lt.s32.totalorder %v60, 16
  %v168 = vsel %vm167, %v164, %v166
  %v169 = vsel %vm167, %v162, %v164
  %v170 = vsel %vm167, %v160, %v162
  %v171 = vsel %vm167, %v166, %v160
  %s172 = scalar_lea.vmem %s4, 4
  %v173 = vld [vmem:[%s172] sm:$0xf]
  %v174 = vpack.c.bf16 %v173, %v173
  %v175 = vpack.c.bf16 %v171, %v171
  %v176 = vpack.c.bf16 %v170, %v170
  %v177 = vpack.c.bf16 %v169, %v169
  %v178 = vpack.c.bf16 %v168, %v168
  %v180 = vsel %vm72, %v174, 0
  %v183 = vsel %vm76, %v175, 0
  %v186 = vsel %vm76, %v176, 0
  %v189 = vsel %vm76, %v177, 0
  %v192 = vsel %vm76, %v178, 0
  %194 = vmatpush.bf16.msra.mxu0 0
  %195 = vmatpush.bf16.msra.mxu0 0
  %196 = vmatpush.bf16.msra.mxu0 0
  %197 = vmatpush.bf16.msra.mxu0 0
  %198 = vmatpush.bf16.msra.mxu0 0
  %199 = vmatpush.bf16.msra.mxu0 0
  %200 = vmatpush.bf16.msra.mxu0 0
  %201 = vmatpush.bf16.msra.mxu0 %v183
  %202 = vmatmul.bf16.gmra.mxu0 %v180
  %v203 = vpop.f32.mrf.mxu0
  %v204 = vadd.f32 0.0, %v203
  %v205 = vpop.f32.mrf.mxu0
  %206 = vdwg.mxu0
  %207 = vmatpush.bf16.msra.mxu0 0
  %208 = vmatpush.bf16.msra.mxu0 0
  %209 = vmatpush.bf16.msra.mxu0 0
  %210 = vmatpush.bf16.msra.mxu0 0
  %211 = vmatpush.bf16.msra.mxu0 0
  %212 = vmatpush.bf16.msra.mxu0 0
  %213 = vmatpush.bf16.msra.mxu0 0
  %214 = vmatpush.bf16.msra.mxu0 %v186
  %215 = vmatmul.bf16.gmra.mxu0 %v180
  %v216 = vpop.f32.mrf.mxu0
  %v217 = vadd.f32 0.0, %v216
  %v218 = vpop.f32.mrf.mxu0
  %219 = vdwg.mxu0
  %220 = vmatpush.bf16.msra.mxu0 0
  %221 = vmatpush.bf16.msra.mxu0 0
  %222 = vmatpush.bf16.msra.mxu0 0
  %223 = vmatpush.bf16.msra.mxu0 0
  %224 = vmatpush.bf16.msra.mxu0 0
  %225 = vmatpush.bf16.msra.mxu0 0
  %226 = vmatpush.bf16.msra.mxu0 0
  %227 = vmatpush.bf16.msra.mxu0 %v189
  %228 = vmatmul.bf16.gmra.mxu0 %v180
  %v229 = vpop.f32.mrf.mxu0
  %v230 = vadd.f32 0.0, %v229
  %v231 = vpop.f32.mrf.mxu0
  %232 = vdwg.mxu0
  %233 = vmatpush.bf16.msra.mxu0 0
  %234 = vmatpush.bf16.msra.mxu0 0
  %235 = vmatpush.bf16.msra.mxu0 0
  %236 = vmatpush.bf16.msra.mxu0 0
  %237 = vmatpush.bf16.msra.mxu0 0
  %238 = vmatpush.bf16.msra.mxu0 0
  %239 = vmatpush.bf16.msra.mxu0 0
  %240 = vmatpush.bf16.msra.mxu0 %v192
  %241 = vmatmul.bf16.gmra.mxu0 %v180
  %v242 = vpop.f32.mrf.mxu0
  %v243 = vadd.f32 0.0, %v242
  %v244 = vpop.f32.mrf.mxu0
  %245 = vdwg.mxu0
  %s246 = scalar_lea.vmem %s3, 1
  %v247 = vld [vmem:[%s246] ss:$8 sm:$0xf]
  %v249 = vperm.slane %v247, 0
  %v250 = vperm.slane %v247, 1
  %v251 = vperm.slane %v247, 2
  %v252 = vperm.slane %v247, 3
  %v257 = vmul.f32 %v204, %v249
  %v258 = vmul.f32 %v217, %v250
  %v259 = vmul.f32 %v230, %v251
  %v260 = vmul.f32 %v243, %v252
  %v261 = vadd.f32 %v155, %v257
  %v262 = vadd.f32 %v156, %v258
  %v263 = vadd.f32 %v157, %v259
  %v264 = vadd.f32 %v158, %v260
  %265 = vrot.lane.b32.xlu0 %v46, 15
  %v266 = vpop.permute.xlu0 %265
  %267 = vrot.lane.b32.xlu0 %v47, 15
  %v268 = vpop.permute.xlu0 %267
  %269 = vrot.lane.b32.xlu0 %v49, 15
  %v270 = vpop.permute.xlu0 %269
  %271 = vrot.lane.b32.xlu0 %v50, 15
  %v272 = vpop.permute.xlu0 %271
  %vm273 = vcmp.lt.s32.totalorder %v60, 15
  %v274 = vsel %vm273, %v270, %v272
  %v275 = vsel %vm273, %v268, %v270
  %v276 = vsel %vm273, %v266, %v268
  %v277 = vsel %vm273, %v272, %v266
  %s278 = scalar_lea.vmem %s4, 8
  %v279 = vld [vmem:[%s278] sm:$0xf]
  %v280 = vpack.c.bf16 %v279, %v279
  %v281 = vpack.c.bf16 %v277, %v277
  %v282 = vpack.c.bf16 %v276, %v276
  %v283 = vpack.c.bf16 %v275, %v275
  %v284 = vpack.c.bf16 %v274, %v274
  %v286 = vsel %vm72, %v280, 0
  %v289 = vsel %vm76, %v281, 0
  %v292 = vsel %vm76, %v282, 0
  %v295 = vsel %vm76, %v283, 0
  %v298 = vsel %vm76, %v284, 0
  %300 = vmatpush.bf16.msra.mxu0 0
  %301 = vmatpush.bf16.msra.mxu0 0
  %302 = vmatpush.bf16.msra.mxu0 0
  %303 = vmatpush.bf16.msra.mxu0 0
  %304 = vmatpush.bf16.msra.mxu0 0
  %305 = vmatpush.bf16.msra.mxu0 0
  %306 = vmatpush.bf16.msra.mxu0 0
  %307 = vmatpush.bf16.msra.mxu0 %v289
  %308 = vmatmul.bf16.gmra.mxu0 %v286
  %v309 = vpop.f32.mrf.mxu0
  %v310 = vadd.f32 0.0, %v309
  %v311 = vpop.f32.mrf.mxu0
  %312 = vdwg.mxu0
  %313 = vmatpush.bf16.msra.mxu0 0
  %314 = vmatpush.bf16.msra.mxu0 0
  %315 = vmatpush.bf16.msra.mxu0 0
  %316 = vmatpush.bf16.msra.mxu0 0
  %317 = vmatpush.bf16.msra.mxu0 0
  %318 = vmatpush.bf16.msra.mxu0 0
  %319 = vmatpush.bf16.msra.mxu0 0
  %320 = vmatpush.bf16.msra.mxu0 %v292
  %321 = vmatmul.bf16.gmra.mxu0 %v286
  %v322 = vpop.f32.mrf.mxu0
  %v323 = vadd.f32 0.0, %v322
  %v324 = vpop.f32.mrf.mxu0
  %325 = vdwg.mxu0
  %326 = vmatpush.bf16.msra.mxu0 0
  %327 = vmatpush.bf16.msra.mxu0 0
  %328 = vmatpush.bf16.msra.mxu0 0
  %329 = vmatpush.bf16.msra.mxu0 0
  %330 = vmatpush.bf16.msra.mxu0 0
  %331 = vmatpush.bf16.msra.mxu0 0
  %332 = vmatpush.bf16.msra.mxu0 0
  %333 = vmatpush.bf16.msra.mxu0 %v295
  %334 = vmatmul.bf16.gmra.mxu0 %v286
  %v335 = vpop.f32.mrf.mxu0
  %v336 = vadd.f32 0.0, %v335
  %v337 = vpop.f32.mrf.mxu0
  %338 = vdwg.mxu0
  %339 = vmatpush.bf16.msra.mxu0 0
  %340 = vmatpush.bf16.msra.mxu0 0
  %341 = vmatpush.bf16.msra.mxu0 0
  %342 = vmatpush.bf16.msra.mxu0 0
  %343 = vmatpush.bf16.msra.mxu0 0
  %344 = vmatpush.bf16.msra.mxu0 0
  %345 = vmatpush.bf16.msra.mxu0 0
  %346 = vmatpush.bf16.msra.mxu0 %v298
  %347 = vmatmul.bf16.gmra.mxu0 %v286
  %v348 = vpop.f32.mrf.mxu0
  %v349 = vadd.f32 0.0, %v348
  %v350 = vpop.f32.mrf.mxu0
  %351 = vdwg.mxu0
  %s352 = scalar_lea.vmem %s3, 2
  %v353 = vld [vmem:[%s352] ss:$8 sm:$0xf]
  %v355 = vperm.slane %v353, 0
  %v356 = vperm.slane %v353, 1
  %v357 = vperm.slane %v353, 2
  %v358 = vperm.slane %v353, 3
  %v363 = vmul.f32 %v310, %v355
  %v364 = vmul.f32 %v323, %v356
  %v365 = vmul.f32 %v336, %v357
  %v366 = vmul.f32 %v349, %v358
  %v367 = vadd.f32 %v261, %v363
  %v368 = vadd.f32 %v262, %v364
  %v369 = vadd.f32 %v263, %v365
  %v370 = vadd.f32 %v264, %v366
  %371 = vrot.lane.b32.xlu0 %v46, 1
  %v372 = vpop.permute.xlu0 %371
  %373 = vrot.lane.b32.xlu0 %v47, 1
  %v374 = vpop.permute.xlu0 %373
  %375 = vrot.lane.b32.xlu0 %v49, 1
  %v376 = vpop.permute.xlu0 %375
  %377 = vrot.lane.b32.xlu0 %v50, 1
  %v378 = vpop.permute.xlu0 %377
  %vm379 = vcmp.lt.s32.totalorder %v60, 1
  %v380 = vsel %vm379, %v376, %v378
  %v381 = vsel %vm379, %v374, %v376
  %v382 = vsel %vm379, %v372, %v374
  %v383 = vsel %vm379, %v378, %v372
  %s384 = scalar_lea.vmem %s4, 12
  %v385 = vld [vmem:[%s384] sm:$0xf]
  %v386 = vpack.c.bf16 %v385, %v385
  %v387 = vpack.c.bf16 %v383, %v383
  %v388 = vpack.c.bf16 %v382, %v382
  %v389 = vpack.c.bf16 %v381, %v381
  %v390 = vpack.c.bf16 %v380, %v380
  %v392 = vsel %vm72, %v386, 0
  %v395 = vsel %vm76, %v387, 0
  %v398 = vsel %vm76, %v388, 0
  %v401 = vsel %vm76, %v389, 0
  %v404 = vsel %vm76, %v390, 0
  %406 = vmatpush.bf16.msra.mxu0 0
  %407 = vmatpush.bf16.msra.mxu0 0
  %408 = vmatpush.bf16.msra.mxu0 0
  %409 = vmatpush.bf16.msra.mxu0 0
  %410 = vmatpush.bf16.msra.mxu0 0
  %411 = vmatpush.bf16.msra.mxu0 0
  %412 = vmatpush.bf16.msra.mxu0 0
  %413 = vmatpush.bf16.msra.mxu0 %v395
  %414 = vmatmul.bf16.gmra.mxu0 %v392
  %v415 = vpop.f32.mrf.mxu0
  %v416 = vadd.f32 0.0, %v415
  %v417 = vpop.f32.mrf.mxu0
  %418 = vdwg.mxu0
  %419 = vmatpush.bf16.msra.mxu0 0
  %420 = vmatpush.bf16.msra.mxu0 0
  %421 = vmatpush.bf16.msra.mxu0 0
  %422 = vmatpush.bf16.msra.mxu0 0
  %423 = vmatpush.bf16.msra.mxu0 0
  %424 = vmatpush.bf16.msra.mxu0 0
  %425 = vmatpush.bf16.msra.mxu0 0
  %426 = vmatpush.bf16.msra.mxu0 %v398
  %427 = vmatmul.bf16.gmra.mxu0 %v392
  %v428 = vpop.f32.mrf.mxu0
  %v429 = vadd.f32 0.0, %v428
  %v430 = vpop.f32.mrf.mxu0
  %431 = vdwg.mxu0
  %432 = vmatpush.bf16.msra.mxu0 0
  %433 = vmatpush.bf16.msra.mxu0 0
  %434 = vmatpush.bf16.msra.mxu0 0
  %435 = vmatpush.bf16.msra.mxu0 0
  %436 = vmatpush.bf16.msra.mxu0 0
  %437 = vmatpush.bf16.msra.mxu0 0
  %438 = vmatpush.bf16.msra.mxu0 0
  %439 = vmatpush.bf16.msra.mxu0 %v401
  %440 = vmatmul.bf16.gmra.mxu0 %v392
  %v441 = vpop.f32.mrf.mxu0
  %v442 = vadd.f32 0.0, %v441
  %v443 = vpop.f32.mrf.mxu0
  %444 = vdwg.mxu0
  %445 = vmatpush.bf16.msra.mxu0 0
  %446 = vmatpush.bf16.msra.mxu0 0
  %447 = vmatpush.bf16.msra.mxu0 0
  %448 = vmatpush.bf16.msra.mxu0 0
  %449 = vmatpush.bf16.msra.mxu0 0
  %450 = vmatpush.bf16.msra.mxu0 0
  %451 = vmatpush.bf16.msra.mxu0 0
  %452 = vmatpush.bf16.msra.mxu0 %v404
  %453 = vmatmul.bf16.gmra.mxu0 %v392
  %v454 = vpop.f32.mrf.mxu0
  %v455 = vadd.f32 0.0, %v454
  %v456 = vpop.f32.mrf.mxu0
  %457 = vdwg.mxu0
  %s458 = scalar_lea.vmem %s3, 3
  %v459 = vld [vmem:[%s458] ss:$8 sm:$0xf]
  %v461 = vperm.slane %v459, 0
  %v462 = vperm.slane %v459, 1
  %v463 = vperm.slane %v459, 2
  %v464 = vperm.slane %v459, 3
  %v469 = vmul.f32 %v416, %v461
  %v470 = vmul.f32 %v429, %v462
  %v471 = vmul.f32 %v442, %v463
  %v472 = vmul.f32 %v455, %v464
  %v473 = vadd.f32 %v367, %v469
  %v474 = vadd.f32 %v368, %v470
  %v475 = vadd.f32 %v369, %v471
  %v476 = vadd.f32 %v370, %v472
  %s477 = scalar_lea.vmem %s4, 16
  %v478 = vld [vmem:[%s477] sm:$0xf]
  %v479 = vpack.c.bf16 %v478, %v478
  %v480 = vpack.c.bf16 %v46, %v46
  %v481 = vpack.c.bf16 %v47, %v47
  %v482 = vpack.c.bf16 %v49, %v49
  %v483 = vpack.c.bf16 %v50, %v50
  %v485 = vsel %vm72, %v479, 0
  %v488 = vsel %vm76, %v480, 0
  %v491 = vsel %vm76, %v481, 0
  %v494 = vsel %vm76, %v482, 0
  %v497 = vsel %vm76, %v483, 0
  %499 = vmatpush.bf16.msra.mxu0 0
  %500 = vmatpush.bf16.msra.mxu0 0
  %501 = vmatpush.bf16.msra.mxu0 0
  %502 = vmatpush.bf16.msra.mxu0 0
  %503 = vmatpush.bf16.msra.mxu0 0
  %504 = vmatpush.bf16.msra.mxu0 0
  %505 = vmatpush.bf16.msra.mxu0 0
  %506 = vmatpush.bf16.msra.mxu0 %v488
  %507 = vmatmul.bf16.gmra.mxu0 %v485
  %v508 = vpop.f32.mrf.mxu0
  %v509 = vadd.f32 0.0, %v508
  %v510 = vpop.f32.mrf.mxu0
  %511 = vdwg.mxu0
  %512 = vmatpush.bf16.msra.mxu0 0
  %513 = vmatpush.bf16.msra.mxu0 0
  %514 = vmatpush.bf16.msra.mxu0 0
  %515 = vmatpush.bf16.msra.mxu0 0
  %516 = vmatpush.bf16.msra.mxu0 0
  %517 = vmatpush.bf16.msra.mxu0 0
  %518 = vmatpush.bf16.msra.mxu0 0
  %519 = vmatpush.bf16.msra.mxu0 %v491
  %520 = vmatmul.bf16.gmra.mxu0 %v485
  %v521 = vpop.f32.mrf.mxu0
  %v522 = vadd.f32 0.0, %v521
  %v523 = vpop.f32.mrf.mxu0
  %524 = vdwg.mxu0
  %525 = vmatpush.bf16.msra.mxu0 0
  %526 = vmatpush.bf16.msra.mxu0 0
  %527 = vmatpush.bf16.msra.mxu0 0
  %528 = vmatpush.bf16.msra.mxu0 0
  %529 = vmatpush.bf16.msra.mxu0 0
  %530 = vmatpush.bf16.msra.mxu0 0
  %531 = vmatpush.bf16.msra.mxu0 0
  %532 = vmatpush.bf16.msra.mxu0 %v494
  %533 = vmatmul.bf16.gmra.mxu0 %v485
  %v534 = vpop.f32.mrf.mxu0
  %v535 = vadd.f32 0.0, %v534
  %v536 = vpop.f32.mrf.mxu0
  %537 = vdwg.mxu0
  %538 = vmatpush.bf16.msra.mxu0 0
  %539 = vmatpush.bf16.msra.mxu0 0
  %540 = vmatpush.bf16.msra.mxu0 0
  %541 = vmatpush.bf16.msra.mxu0 0
  %542 = vmatpush.bf16.msra.mxu0 0
  %543 = vmatpush.bf16.msra.mxu0 0
  %544 = vmatpush.bf16.msra.mxu0 0
  %545 = vmatpush.bf16.msra.mxu0 %v497
  %546 = vmatmul.bf16.gmra.mxu0 %v485
  %v547 = vpop.f32.mrf.mxu0
  %v548 = vadd.f32 0.0, %v547
  %v549 = vpop.f32.mrf.mxu0
  %550 = vdwg.mxu0
  %v551 = vadd.f32 %v473, %v509
  %v552 = vadd.f32 %v474, %v522
  %v553 = vadd.f32 %v475, %v535
  %v554 = vadd.f32 %v476, %v548
  %555 = vrot.lane.b32.xlu0 %v46, 127
  %v556 = vpop.permute.xlu0 %555
  %557 = vrot.lane.b32.xlu0 %v47, 127
  %v558 = vpop.permute.xlu0 %557
  %559 = vrot.lane.b32.xlu0 %v49, 127
  %v560 = vpop.permute.xlu0 %559
  %561 = vrot.lane.b32.xlu0 %v50, 127
  %v562 = vpop.permute.xlu0 %561
  %vm563 = vcmp.lt.s32.totalorder %v60, 127
  %v564 = vsel %vm563, %v560, %v562
  %v565 = vsel %vm563, %v558, %v560
  %v566 = vsel %vm563, %v556, %v558
  %v567 = vsel %vm563, %v562, %v556
  %s568 = scalar_lea.vmem %s4, 20
  %v569 = vld [vmem:[%s568] sm:$0xf]
  %v570 = vpack.c.bf16 %v569, %v569
  %v571 = vpack.c.bf16 %v566, %v566
  %v572 = vpack.c.bf16 %v565, %v565
  %v573 = vpack.c.bf16 %v564, %v564
  %v574 = vpack.c.bf16 %v567, %v567
  %v576 = vsel %vm72, %v570, 0
  %v579 = vsel %vm76, %v571, 0
  %v582 = vsel %vm76, %v572, 0
  %v585 = vsel %vm76, %v573, 0
  %v588 = vsel %vm76, %v574, 0
  %590 = vmatpush.bf16.msra.mxu0 0
  %591 = vmatpush.bf16.msra.mxu0 0
  %592 = vmatpush.bf16.msra.mxu0 0
  %593 = vmatpush.bf16.msra.mxu0 0
  %594 = vmatpush.bf16.msra.mxu0 0
  %595 = vmatpush.bf16.msra.mxu0 0
  %596 = vmatpush.bf16.msra.mxu0 0
  %597 = vmatpush.bf16.msra.mxu0 %v579
  %598 = vmatmul.bf16.gmra.mxu0 %v576
  %v599 = vpop.f32.mrf.mxu0
  %v600 = vadd.f32 0.0, %v599
  %v601 = vpop.f32.mrf.mxu0
  %602 = vdwg.mxu0
  %603 = vmatpush.bf16.msra.mxu0 0
  %604 = vmatpush.bf16.msra.mxu0 0
  %605 = vmatpush.bf16.msra.mxu0 0
  %606 = vmatpush.bf16.msra.mxu0 0
  %607 = vmatpush.bf16.msra.mxu0 0
  %608 = vmatpush.bf16.msra.mxu0 0
  %609 = vmatpush.bf16.msra.mxu0 0
  %610 = vmatpush.bf16.msra.mxu0 %v582
  %611 = vmatmul.bf16.gmra.mxu0 %v576
  %v612 = vpop.f32.mrf.mxu0
  %v613 = vadd.f32 0.0, %v612
  %v614 = vpop.f32.mrf.mxu0
  %615 = vdwg.mxu0
  %616 = vmatpush.bf16.msra.mxu0 0
  %617 = vmatpush.bf16.msra.mxu0 0
  %618 = vmatpush.bf16.msra.mxu0 0
  %619 = vmatpush.bf16.msra.mxu0 0
  %620 = vmatpush.bf16.msra.mxu0 0
  %621 = vmatpush.bf16.msra.mxu0 0
  %622 = vmatpush.bf16.msra.mxu0 0
  %623 = vmatpush.bf16.msra.mxu0 %v585
  %624 = vmatmul.bf16.gmra.mxu0 %v576
  %v625 = vpop.f32.mrf.mxu0
  %v626 = vadd.f32 0.0, %v625
  %v627 = vpop.f32.mrf.mxu0
  %628 = vdwg.mxu0
  %629 = vmatpush.bf16.msra.mxu0 0
  %630 = vmatpush.bf16.msra.mxu0 0
  %631 = vmatpush.bf16.msra.mxu0 0
  %632 = vmatpush.bf16.msra.mxu0 0
  %633 = vmatpush.bf16.msra.mxu0 0
  %634 = vmatpush.bf16.msra.mxu0 0
  %635 = vmatpush.bf16.msra.mxu0 0
  %636 = vmatpush.bf16.msra.mxu0 %v588
  %637 = vmatmul.bf16.gmra.mxu0 %v576
  %v638 = vpop.f32.mrf.mxu0
  %v639 = vadd.f32 0.0, %v638
  %v640 = vpop.f32.mrf.mxu0
  %641 = vdwg.mxu0
  %s642 = scalar_lea.vmem %s3, 5
  %v643 = vld [vmem:[%s642] ss:$8 sm:$0xf]
  %v645 = vperm.slane %v643, 0
  %v646 = vperm.slane %v643, 1
  %v647 = vperm.slane %v643, 2
  %v648 = vperm.slane %v643, 3
  %v653 = vmul.f32 %v600, %v645
  %v654 = vmul.f32 %v613, %v646
  %v655 = vmul.f32 %v626, %v647
  %v656 = vmul.f32 %v639, %v648
  %v657 = vadd.f32 %v551, %v653
  %v658 = vadd.f32 %v552, %v654
  %v659 = vadd.f32 %v553, %v655
  %v660 = vadd.f32 %v554, %v656
  %661 = vrot.lane.b32.xlu0 %v46, 113
  %v662 = vpop.permute.xlu0 %661
  %663 = vrot.lane.b32.xlu0 %v47, 113
  %v664 = vpop.permute.xlu0 %663
  %665 = vrot.lane.b32.xlu0 %v49, 113
  %v666 = vpop.permute.xlu0 %665
  %667 = vrot.lane.b32.xlu0 %v50, 113
  %v668 = vpop.permute.xlu0 %667
  %vm669 = vcmp.lt.s32.totalorder %v60, 113
  %v670 = vsel %vm669, %v666, %v668
  %v671 = vsel %vm669, %v664, %v666
  %v672 = vsel %vm669, %v662, %v664
  %v673 = vsel %vm669, %v668, %v662
  %s674 = scalar_lea.vmem %s4, 24
  %v675 = vld [vmem:[%s674] sm:$0xf]
  %v676 = vpack.c.bf16 %v675, %v675
  %v677 = vpack.c.bf16 %v672, %v672
  %v678 = vpack.c.bf16 %v671, %v671
  %v679 = vpack.c.bf16 %v670, %v670
  %v680 = vpack.c.bf16 %v673, %v673
  %v682 = vsel %vm72, %v676, 0
  %v685 = vsel %vm76, %v677, 0
  %v688 = vsel %vm76, %v678, 0
  %v691 = vsel %vm76, %v679, 0
  %v694 = vsel %vm76, %v680, 0
  %696 = vmatpush.bf16.msra.mxu0 0
  %697 = vmatpush.bf16.msra.mxu0 0
  %698 = vmatpush.bf16.msra.mxu0 0
  %699 = vmatpush.bf16.msra.mxu0 0
  %700 = vmatpush.bf16.msra.mxu0 0
  %701 = vmatpush.bf16.msra.mxu0 0
  %702 = vmatpush.bf16.msra.mxu0 0
  %703 = vmatpush.bf16.msra.mxu0 %v685
  %704 = vmatmul.bf16.gmra.mxu0 %v682
  %v705 = vpop.f32.mrf.mxu0
  %v706 = vadd.f32 0.0, %v705
  %v707 = vpop.f32.mrf.mxu0
  %708 = vdwg.mxu0
  %709 = vmatpush.bf16.msra.mxu0 0
  %710 = vmatpush.bf16.msra.mxu0 0
  %711 = vmatpush.bf16.msra.mxu0 0
  %712 = vmatpush.bf16.msra.mxu0 0
  %713 = vmatpush.bf16.msra.mxu0 0
  %714 = vmatpush.bf16.msra.mxu0 0
  %715 = vmatpush.bf16.msra.mxu0 0
  %716 = vmatpush.bf16.msra.mxu0 %v688
  %717 = vmatmul.bf16.gmra.mxu0 %v682
  %v718 = vpop.f32.mrf.mxu0
  %v719 = vadd.f32 0.0, %v718
  %v720 = vpop.f32.mrf.mxu0
  %721 = vdwg.mxu0
  %722 = vmatpush.bf16.msra.mxu0 0
  %723 = vmatpush.bf16.msra.mxu0 0
  %724 = vmatpush.bf16.msra.mxu0 0
  %725 = vmatpush.bf16.msra.mxu0 0
  %726 = vmatpush.bf16.msra.mxu0 0
  %727 = vmatpush.bf16.msra.mxu0 0
  %728 = vmatpush.bf16.msra.mxu0 0
  %729 = vmatpush.bf16.msra.mxu0 %v691
  %730 = vmatmul.bf16.gmra.mxu0 %v682
  %v731 = vpop.f32.mrf.mxu0
  %v732 = vadd.f32 0.0, %v731
  %v733 = vpop.f32.mrf.mxu0
  %734 = vdwg.mxu0
  %735 = vmatpush.bf16.msra.mxu0 0
  %736 = vmatpush.bf16.msra.mxu0 0
  %737 = vmatpush.bf16.msra.mxu0 0
  %738 = vmatpush.bf16.msra.mxu0 0
  %739 = vmatpush.bf16.msra.mxu0 0
  %740 = vmatpush.bf16.msra.mxu0 0
  %741 = vmatpush.bf16.msra.mxu0 0
  %742 = vmatpush.bf16.msra.mxu0 %v694
  %743 = vmatmul.bf16.gmra.mxu0 %v682
  %v744 = vpop.f32.mrf.mxu0
  %v745 = vadd.f32 0.0, %v744
  %v746 = vpop.f32.mrf.mxu0
  %747 = vdwg.mxu0
  %s748 = scalar_lea.vmem %s3, 6
  %v749 = vld [vmem:[%s748] ss:$8 sm:$0xf]
  %v751 = vperm.slane %v749, 0
  %v752 = vperm.slane %v749, 1
  %v753 = vperm.slane %v749, 2
  %v754 = vperm.slane %v749, 3
  %v759 = vmul.f32 %v706, %v751
  %v760 = vmul.f32 %v719, %v752
  %v761 = vmul.f32 %v732, %v753
  %v762 = vmul.f32 %v745, %v754
  %v763 = vadd.f32 %v657, %v759
  %v764 = vadd.f32 %v658, %v760
  %v765 = vadd.f32 %v659, %v761
  %v766 = vadd.f32 %v660, %v762
  %767 = vrot.lane.b32.xlu0 %v46, 112
  %v768 = vpop.permute.xlu0 %767
  %769 = vrot.lane.b32.xlu0 %v47, 112
  %v770 = vpop.permute.xlu0 %769
  %771 = vrot.lane.b32.xlu0 %v49, 112
  %v772 = vpop.permute.xlu0 %771
  %773 = vrot.lane.b32.xlu0 %v50, 112
  %v774 = vpop.permute.xlu0 %773
  %vm775 = vcmp.lt.s32.totalorder %v60, 112
  %v776 = vsel %vm775, %v772, %v774
  %v777 = vsel %vm775, %v770, %v772
  %v778 = vsel %vm775, %v768, %v770
  %v779 = vsel %vm775, %v774, %v768
  %s780 = scalar_lea.vmem %s4, 28
  %v781 = vld [vmem:[%s780] sm:$0xf]
  %v782 = vpack.c.bf16 %v781, %v781
  %v783 = vpack.c.bf16 %v778, %v778
  %v784 = vpack.c.bf16 %v777, %v777
  %v785 = vpack.c.bf16 %v776, %v776
  %v786 = vpack.c.bf16 %v779, %v779
  %v788 = vsel %vm72, %v782, 0
  %v791 = vsel %vm76, %v783, 0
  %v794 = vsel %vm76, %v784, 0
  %v797 = vsel %vm76, %v785, 0
  %v800 = vsel %vm76, %v786, 0
  %802 = vmatpush.bf16.msra.mxu0 0
  %803 = vmatpush.bf16.msra.mxu0 0
  %804 = vmatpush.bf16.msra.mxu0 0
  %805 = vmatpush.bf16.msra.mxu0 0
  %806 = vmatpush.bf16.msra.mxu0 0
  %807 = vmatpush.bf16.msra.mxu0 0
  %808 = vmatpush.bf16.msra.mxu0 0
  %809 = vmatpush.bf16.msra.mxu0 %v791
  %810 = vmatmul.bf16.gmra.mxu0 %v788
  %v811 = vpop.f32.mrf.mxu0
  %v812 = vadd.f32 0.0, %v811
  %v813 = vpop.f32.mrf.mxu0
  %814 = vdwg.mxu0
  %815 = vmatpush.bf16.msra.mxu0 0
  %816 = vmatpush.bf16.msra.mxu0 0
  %817 = vmatpush.bf16.msra.mxu0 0
  %818 = vmatpush.bf16.msra.mxu0 0
  %819 = vmatpush.bf16.msra.mxu0 0
  %820 = vmatpush.bf16.msra.mxu0 0
  %821 = vmatpush.bf16.msra.mxu0 0
  %822 = vmatpush.bf16.msra.mxu0 %v794
  %823 = vmatmul.bf16.gmra.mxu0 %v788
  %v824 = vpop.f32.mrf.mxu0
  %v825 = vadd.f32 0.0, %v824
  %v826 = vpop.f32.mrf.mxu0
  %827 = vdwg.mxu0
  %828 = vmatpush.bf16.msra.mxu0 0
  %829 = vmatpush.bf16.msra.mxu0 0
  %830 = vmatpush.bf16.msra.mxu0 0
  %831 = vmatpush.bf16.msra.mxu0 0
  %832 = vmatpush.bf16.msra.mxu0 0
  %833 = vmatpush.bf16.msra.mxu0 0
  %834 = vmatpush.bf16.msra.mxu0 0
  %835 = vmatpush.bf16.msra.mxu0 %v797
  %836 = vmatmul.bf16.gmra.mxu0 %v788
  %v837 = vpop.f32.mrf.mxu0
  %v838 = vadd.f32 0.0, %v837
  %v839 = vpop.f32.mrf.mxu0
  %840 = vdwg.mxu0
  %841 = vmatpush.bf16.msra.mxu0 0
  %842 = vmatpush.bf16.msra.mxu0 0
  %843 = vmatpush.bf16.msra.mxu0 0
  %844 = vmatpush.bf16.msra.mxu0 0
  %845 = vmatpush.bf16.msra.mxu0 0
  %846 = vmatpush.bf16.msra.mxu0 0
  %847 = vmatpush.bf16.msra.mxu0 0
  %848 = vmatpush.bf16.msra.mxu0 %v800
  %849 = vmatmul.bf16.gmra.mxu0 %v788
  %v850 = vpop.f32.mrf.mxu0
  %v851 = vadd.f32 0.0, %v850
  %v852 = vpop.f32.mrf.mxu0
  %853 = vdwg.mxu0
  %s854 = scalar_lea.vmem %s3, 7
  %v855 = vld [vmem:[%s854] ss:$8 sm:$0xf]
  %v857 = vperm.slane %v855, 0
  %v858 = vperm.slane %v855, 1
  %v859 = vperm.slane %v855, 2
  %v860 = vperm.slane %v855, 3
  %v865 = vmul.f32 %v812, %v857
  %v866 = vmul.f32 %v825, %v858
  %v867 = vmul.f32 %v838, %v859
  %v868 = vmul.f32 %v851, %v860
  %v869 = vadd.f32 %v763, %v865
  %v870 = vadd.f32 %v764, %v866
  %v871 = vadd.f32 %v765, %v867
  %v872 = vadd.f32 %v766, %v868
  %873 = vrot.lane.b32.xlu0 %v46, 111
  %v874 = vpop.permute.xlu0 %873
  %875 = vrot.lane.b32.xlu0 %v47, 111
  %v876 = vpop.permute.xlu0 %875
  %877 = vrot.lane.b32.xlu0 %v49, 111
  %v878 = vpop.permute.xlu0 %877
  %879 = vrot.lane.b32.xlu0 %v50, 111
  %v880 = vpop.permute.xlu0 %879
  %vm881 = vcmp.lt.s32.totalorder %v60, 111
  %v882 = vsel %vm881, %v878, %v880
  %v883 = vsel %vm881, %v876, %v878
  %v884 = vsel %vm881, %v874, %v876
  %v885 = vsel %vm881, %v880, %v874
  %s886 = scalar_lea.vmem %s4, 32
  %v887 = vld [vmem:[%s886] sm:$0xf]
  %v888 = vpack.c.bf16 %v887, %v887
  %v889 = vpack.c.bf16 %v884, %v884
  %v890 = vpack.c.bf16 %v883, %v883
  %v891 = vpack.c.bf16 %v882, %v882
  %v892 = vpack.c.bf16 %v885, %v885
  %v894 = vsel %vm72, %v888, 0
  %v897 = vsel %vm76, %v889, 0
  %v900 = vsel %vm76, %v890, 0
  %v903 = vsel %vm76, %v891, 0
  %v906 = vsel %vm76, %v892, 0
  %908 = vmatpush.bf16.msra.mxu0 0
  %909 = vmatpush.bf16.msra.mxu0 0
  %910 = vmatpush.bf16.msra.mxu0 0
  %911 = vmatpush.bf16.msra.mxu0 0
  %912 = vmatpush.bf16.msra.mxu0 0
  %913 = vmatpush.bf16.msra.mxu0 0
  %914 = vmatpush.bf16.msra.mxu0 0
  %915 = vmatpush.bf16.msra.mxu0 %v897
  %916 = vmatmul.bf16.gmra.mxu0 %v894
  %v917 = vpop.f32.mrf.mxu0
  %v918 = vadd.f32 0.0, %v917
  %v919 = vpop.f32.mrf.mxu0
  %920 = vdwg.mxu0
  %921 = vmatpush.bf16.msra.mxu0 0
  %922 = vmatpush.bf16.msra.mxu0 0
  %923 = vmatpush.bf16.msra.mxu0 0
  %924 = vmatpush.bf16.msra.mxu0 0
  %925 = vmatpush.bf16.msra.mxu0 0
  %926 = vmatpush.bf16.msra.mxu0 0
  %927 = vmatpush.bf16.msra.mxu0 0
  %928 = vmatpush.bf16.msra.mxu0 %v900
  %929 = vmatmul.bf16.gmra.mxu0 %v894
  %v930 = vpop.f32.mrf.mxu0
  %v931 = vadd.f32 0.0, %v930
  %v932 = vpop.f32.mrf.mxu0
  %933 = vdwg.mxu0
  %934 = vmatpush.bf16.msra.mxu0 0
  %935 = vmatpush.bf16.msra.mxu0 0
  %936 = vmatpush.bf16.msra.mxu0 0
  %937 = vmatpush.bf16.msra.mxu0 0
  %938 = vmatpush.bf16.msra.mxu0 0
  %939 = vmatpush.bf16.msra.mxu0 0
  %940 = vmatpush.bf16.msra.mxu0 0
  %941 = vmatpush.bf16.msra.mxu0 %v903
  %942 = vmatmul.bf16.gmra.mxu0 %v894
  %v943 = vpop.f32.mrf.mxu0
  %v944 = vadd.f32 0.0, %v943
  %v945 = vpop.f32.mrf.mxu0
  %946 = vdwg.mxu0
  %947 = vmatpush.bf16.msra.mxu0 0
  %948 = vmatpush.bf16.msra.mxu0 0
  %949 = vmatpush.bf16.msra.mxu0 0
  %950 = vmatpush.bf16.msra.mxu0 0
  %951 = vmatpush.bf16.msra.mxu0 0
  %952 = vmatpush.bf16.msra.mxu0 0
  %953 = vmatpush.bf16.msra.mxu0 0
  %954 = vmatpush.bf16.msra.mxu0 %v906
  %955 = vmatmul.bf16.gmra.mxu0 %v894
  %v956 = vpop.f32.mrf.mxu0
  %v957 = vadd.f32 0.0, %v956
  %v958 = vpop.f32.mrf.mxu0
  %959 = vdwg.mxu0
  %s960 = scalar_lea.vmem %s3, 32
  %v961 = vld [vmem:[%s960] ss:$8 sm:$0xf]
  %v963 = vperm.slane %v961, 0
  %v964 = vperm.slane %v961, 1
  %v965 = vperm.slane %v961, 2
  %v966 = vperm.slane %v961, 3
  %v971 = vmul.f32 %v918, %v963
  %v972 = vmul.f32 %v931, %v964
  %v973 = vmul.f32 %v944, %v965
  %v974 = vmul.f32 %v957, %v966
  %v975 = vadd.f32 %v869, %v971
  %v976 = vadd.f32 %v870, %v972
  %v977 = vadd.f32 %v871, %v973
  %v978 = vadd.f32 %v872, %v974
  %v979 = vld [vmem:[%s5] sm:$0xf]
  %v980 = vld [vmem:[%s6] sm:$0xf]
  %v981 = vsel %vm76, %v975, 0.0
  %v982 = vsel %vm76, %v976, 0.0
  %v983 = vadd.f32 %v981, %v982
  %v984 = vsel %vm76, %v977, 0.0
  %v985 = vadd.f32 %v983, %v984
  %v986 = vsel %vm76, %v978, 0.0
  %v987 = vadd.f32 %v985, %v986
  %988 = vadd.xlane.f32.xlu0 %v987
  %v989 = vpop.xlane.xlu0 %988
  %v990 = vmul.f32 %v989, 0.001953125
  %v991 = vmul.f32 %v975, %v975
  %v992 = vmul.f32 %v976, %v976
  %v993 = vmul.f32 %v977, %v977
  %v994 = vmul.f32 %v978, %v978
  %v995 = vsel %vm76, %v991, 0.0
  %v996 = vsel %vm76, %v992, 0.0
  %v997 = vadd.f32 %v995, %v996
  %v998 = vsel %vm76, %v993, 0.0
  %v999 = vadd.f32 %v997, %v998
  %v1000 = vsel %vm76, %v994, 0.0
  %v1001 = vadd.f32 %v999, %v1000
  %1002 = vadd.xlane.f32.xlu0 %v1001
  %v1003 = vpop.xlane.xlu0 %1002
  %v1004 = vmul.f32 %v1003, 0.001953125
  %v1005 = vmul.f32 %v990, %v990
  %v1006 = vsub.f32 %v1004, %v1005
  %v1007 = vmax.f32 %v1006, 0.0
  %v1008 = vadd.f32 %v1007, 1e-05
  %v1009 = vrsqrt.pop %v1008
  %v1010 = vmul.f32 %v1009, %v1008
  %v1011 = vmul.f32 %v1010, %v1009
  %v1012 = vmul.f32 0.5, %v1011
  %v1013 = vsub.f32 1.5, %v1012
  %v1014 = vmul.f32 %v1009, %v1013
  %vm1015 = vweird.f32 %v1008
  %vm1016 = vweird.f32 %v1009
  %vm1017 = vmor %vm1015, %vm1016
  %v1018 = vsel %vm1017, %v1009, %v1014
  %v1019 = vmul.f32 %v979, %v1018
  %1021 = vset.pattern.permute.xlu0 0
  %1022 = vperm.xlu0 %1021, %v1019
  %v1023 = vpop.permute.xlu0 %1022
  %v1025 = vmul.f32 %v975, %v1023
  %v1026 = vmul.f32 %v976, %v1023
  %v1027 = vmul.f32 %v977, %v1023
  %v1028 = vmul.f32 %v978, %v1023
  %v1029 = vmul.f32 %v990, %v1019
  %v1030 = vsub.f32 %v980, %v1029
  %1032 = vset.pattern.permute.xlu0 0
  %1033 = vperm.xlu0 %1032, %v1030
  %v1034 = vpop.permute.xlu0 %1033
  %v1036 = vadd.f32 %v1025, %v1034
  %v1037 = vadd.f32 %v1026, %v1034
  %v1038 = vadd.f32 %v1027, %v1034
  %v1039 = vadd.f32 %v1028, %v1034
  %v1040 = vmax.f32 %v1036, 0.0
  %v1041 = vmax.f32 %v1037, 0.0
  %v1042 = vmax.f32 %v1038, 0.0
  %v1043 = vmax.f32 %v1039, 0.0
  %v1044 = vld [vmem:[%s1] sm:$0xf]
  %v1045 = vld [vmem:[%s2] sm:$0xff]
  %v1046 = vld [vmem:[%s2 + $0x8] sm:$0xff]
  %v1047 = vld [vmem:[%s2 + $0x10] sm:$0xff]
  %v1048 = vld [vmem:[%s2 + $0x18] sm:$0xff]
  %v1049 = vld [vmem:[%s2 + $0x20] sm:$0xff]
  %v1050 = vld [vmem:[%s2 + $0x28] sm:$0xff]
  %v1051 = vld [vmem:[%s2 + $0x30] sm:$0xff]
  %v1052 = vld [vmem:[%s2 + $0x38] sm:$0xff]
  %v1053 = vld [vmem:[%s2 + $0x40] sm:$0xff]
  %v1054 = vld [vmem:[%s2 + $0x48] sm:$0xff]
  %v1055 = vld [vmem:[%s2 + $0x50] sm:$0xff]
  %v1056 = vld [vmem:[%s2 + $0x58] sm:$0xff]
  %v1057 = vld [vmem:[%s2 + $0x60] sm:$0xff]
  %v1058 = vld [vmem:[%s2 + $0x68] sm:$0xff]
  %v1059 = vld [vmem:[%s2 + $0x70] sm:$0xff]
  %v1060 = vld [vmem:[%s2 + $0x78] sm:$0xff]
  %vm1061 = vcmask 523264
  %v1063 = vsel %vm1061, %v1044, 0
  %1065 = vmatpush.msra.mxu0 0.0
  %1066 = vmatpush.msra.mxu0 0.0
  %1067 = vmatpush.msra.mxu0 0.0
  %1068 = vmatpush.msra.mxu0 0.0
  %1069 = vmatpush.msra.mxu0 0.0
  %1070 = vmatpush.msra.mxu0 0.0
  %1071 = vmatpush.msra.mxu0 0.0
  %1072 = vmatpush.msra.mxu0 0.0
  %1073 = vmatpush.msra.mxu0 %v1059
  %1074 = vmatpush.msra.mxu0 %v1057
  %1075 = vmatpush.msra.mxu0 %v1055
  %1076 = vmatpush.msra.mxu0 %v1053
  %1077 = vmatpush.msra.mxu0 %v1051
  %1078 = vmatpush.msra.mxu0 %v1049
  %1079 = vmatpush.msra.mxu0 %v1047
  %1080 = vmatpush.msra.mxu0 %v1045
  %1081 = vmatmul.f32.gmra.mxu0 %v1063
  %v1082 = vpop.f32.mrf.mxu0
  %v1083 = vadd.f32 0.0, %v1082
  %1084 = vdwg.mxu0
  %1085 = vmatpush.msra.mxu0 0.0
  %1086 = vmatpush.msra.mxu0 0.0
  %1087 = vmatpush.msra.mxu0 0.0
  %1088 = vmatpush.msra.mxu0 0.0
  %1089 = vmatpush.msra.mxu0 0.0
  %1090 = vmatpush.msra.mxu0 0.0
  %1091 = vmatpush.msra.mxu0 0.0
  %1092 = vmatpush.msra.mxu0 0.0
  %1093 = vmatpush.msra.mxu0 %v1060
  %1094 = vmatpush.msra.mxu0 %v1058
  %1095 = vmatpush.msra.mxu0 %v1056
  %1096 = vmatpush.msra.mxu0 %v1054
  %1097 = vmatpush.msra.mxu0 %v1052
  %1098 = vmatpush.msra.mxu0 %v1050
  %1099 = vmatpush.msra.mxu0 %v1048
  %1100 = vmatpush.msra.mxu0 %v1046
  %1101 = vmatmul.f32.gmra.mxu0 %v1063
  %v1102 = vpop.f32.mrf.mxu0
  %v1103 = vadd.f32 0.0, %v1102
  %1104 = vdwg.mxu0
  %s1105 = scalar_lea.vmem %s1, 4
  %v1106 = vld [vmem:[%s1105] sm:$0xf]
  %v1108 = vsel %vm1061, %v1106, 0
  %1110 = vmatpush.msra.mxu0 0.0
  %1111 = vmatpush.msra.mxu0 0.0
  %1112 = vmatpush.msra.mxu0 0.0
  %1113 = vmatpush.msra.mxu0 0.0
  %1114 = vmatpush.msra.mxu0 0.0
  %1115 = vmatpush.msra.mxu0 0.0
  %1116 = vmatpush.msra.mxu0 0.0
  %1117 = vmatpush.msra.mxu0 0.0
  %1118 = vmatpush.msra.mxu0 %v1059
  %1119 = vmatpush.msra.mxu0 %v1057
  %1120 = vmatpush.msra.mxu0 %v1055
  %1121 = vmatpush.msra.mxu0 %v1053
  %1122 = vmatpush.msra.mxu0 %v1051
  %1123 = vmatpush.msra.mxu0 %v1049
  %1124 = vmatpush.msra.mxu0 %v1047
  %1125 = vmatpush.msra.mxu0 %v1045
  %1126 = vmatmul.f32.gmra.mxu0 %v1108
  %v1127 = vpop.f32.mrf.mxu0
  %v1128 = vadd.f32 0.0, %v1127
  %1129 = vdwg.mxu0
  %1130 = vmatpush.msra.mxu0 0.0
  %1131 = vmatpush.msra.mxu0 0.0
  %1132 = vmatpush.msra.mxu0 0.0
  %1133 = vmatpush.msra.mxu0 0.0
  %1134 = vmatpush.msra.mxu0 0.0
  %1135 = vmatpush.msra.mxu0 0.0
  %1136 = vmatpush.msra.mxu0 0.0
  %1137 = vmatpush.msra.mxu0 0.0
  %1138 = vmatpush.msra.mxu0 %v1060
  %1139 = vmatpush.msra.mxu0 %v1058
  %1140 = vmatpush.msra.mxu0 %v1056
  %1141 = vmatpush.msra.mxu0 %v1054
  %1142 = vmatpush.msra.mxu0 %v1052
  %1143 = vmatpush.msra.mxu0 %v1050
  %1144 = vmatpush.msra.mxu0 %v1048
  %1145 = vmatpush.msra.mxu0 %v1046
  %1146 = vmatmul.f32.gmra.mxu0 %v1108
  %v1147 = vpop.f32.mrf.mxu0
  %v1148 = vadd.f32 0.0, %v1147
  %1149 = vdwg.mxu0
  %v1150 = vadd.f32 %v1040, %v1083
  %v1151 = vadd.f32 %v1041, %v1103
  %v1152 = vadd.f32 %v1042, %v1128
  %v1153 = vadd.f32 %v1043, %v1148
  %1154 = vrot.lane.b32.xlu0 %v1150, 17
  %v1155 = vpop.permute.xlu0 %1154
  %1156 = vrot.lane.b32.xlu0 %v1151, 17
  %v1157 = vpop.permute.xlu0 %1156
  %1158 = vrot.lane.b32.xlu0 %v1152, 17
  %v1159 = vpop.permute.xlu0 %1158
  %1160 = vrot.lane.b32.xlu0 %v1153, 17
  %v1161 = vpop.permute.xlu0 %1160
  %v1162 = vsel %vm61, %v1159, %v1161
  %v1163 = vsel %vm61, %v1157, %v1159
  %v1164 = vsel %vm61, %v1155, %v1157
  %v1165 = vsel %vm61, %v1161, %v1155
  %v1166 = vld [vmem:[%s7] sm:$0xf]
  %v1167 = vpack.c.bf16 %v1166, %v1166
  %v1168 = vpack.c.bf16 %v1165, %v1165
  %v1169 = vpack.c.bf16 %v1164, %v1164
  %v1170 = vpack.c.bf16 %v1163, %v1163
  %v1171 = vpack.c.bf16 %v1162, %v1162
  %vm1172 = vcmask 31744
  %v1174 = vsel %vm1172, %v1167, 0
  %vm1176 = vcmask 1041408
  %v1178 = vsel %vm1176, %v1168, 0
  %v1181 = vsel %vm1176, %v1169, 0
  %v1184 = vsel %vm1176, %v1170, 0
  %v1187 = vsel %vm1176, %v1171, 0
  %1189 = vmatpush.bf16.msra.mxu0 0
  %1190 = vmatpush.bf16.msra.mxu0 0
  %1191 = vmatpush.bf16.msra.mxu0 0
  %1192 = vmatpush.bf16.msra.mxu0 0
  %1193 = vmatpush.bf16.msra.mxu0 0
  %1194 = vmatpush.bf16.msra.mxu0 0
  %1195 = vmatpush.bf16.msra.mxu0 0
  %1196 = vmatpush.bf16.msra.mxu0 %v1178
  %1197 = vmatmul.bf16.gmra.mxu0 %v1174
  %v1198 = vpop.f32.mrf.mxu0
  %v1199 = vadd.f32 0.0, %v1198
  %v1200 = vpop.f32.mrf.mxu0
  %1201 = vdwg.mxu0
  %1202 = vmatpush.bf16.msra.mxu0 0
  %1203 = vmatpush.bf16.msra.mxu0 0
  %1204 = vmatpush.bf16.msra.mxu0 0
  %1205 = vmatpush.bf16.msra.mxu0 0
  %1206 = vmatpush.bf16.msra.mxu0 0
  %1207 = vmatpush.bf16.msra.mxu0 0
  %1208 = vmatpush.bf16.msra.mxu0 0
  %1209 = vmatpush.bf16.msra.mxu0 %v1181
  %1210 = vmatmul.bf16.gmra.mxu0 %v1174
  %v1211 = vpop.f32.mrf.mxu0
  %v1212 = vadd.f32 0.0, %v1211
  %v1213 = vpop.f32.mrf.mxu0
  %1214 = vdwg.mxu0
  %1215 = vmatpush.bf16.msra.mxu0 0
  %1216 = vmatpush.bf16.msra.mxu0 0
  %1217 = vmatpush.bf16.msra.mxu0 0
  %1218 = vmatpush.bf16.msra.mxu0 0
  %1219 = vmatpush.bf16.msra.mxu0 0
  %1220 = vmatpush.bf16.msra.mxu0 0
  %1221 = vmatpush.bf16.msra.mxu0 0
  %1222 = vmatpush.bf16.msra.mxu0 %v1184
  %1223 = vmatmul.bf16.gmra.mxu0 %v1174
  %v1224 = vpop.f32.mrf.mxu0
  %v1225 = vadd.f32 0.0, %v1224
  %v1226 = vpop.f32.mrf.mxu0
  %1227 = vdwg.mxu0
  %1228 = vmatpush.bf16.msra.mxu0 0
  %1229 = vmatpush.bf16.msra.mxu0 0
  %1230 = vmatpush.bf16.msra.mxu0 0
  %1231 = vmatpush.bf16.msra.mxu0 0
  %1232 = vmatpush.bf16.msra.mxu0 0
  %1233 = vmatpush.bf16.msra.mxu0 0
  %1234 = vmatpush.bf16.msra.mxu0 0
  %1235 = vmatpush.bf16.msra.mxu0 %v1187
  %1236 = vmatmul.bf16.gmra.mxu0 %v1174
  %v1237 = vpop.f32.mrf.mxu0
  %v1238 = vadd.f32 0.0, %v1237
  %v1239 = vpop.f32.mrf.mxu0
  %1240 = vdwg.mxu0
  %v1241 = vmul.f32 %v1199, %v143
  %v1242 = vmul.f32 %v1212, %v144
  %v1243 = vmul.f32 %v1225, %v145
  %v1244 = vmul.f32 %v1238, %v146
  %v1245 = vadd.f32 %v1241, 0.0
  %v1246 = vadd.f32 %v1242, 0.0
  %v1247 = vadd.f32 %v1243, 0.0
  %v1248 = vadd.f32 %v1244, 0.0
  %1249 = vrot.lane.b32.xlu0 %v1150, 16
  %v1250 = vpop.permute.xlu0 %1249
  %1251 = vrot.lane.b32.xlu0 %v1151, 16
  %v1252 = vpop.permute.xlu0 %1251
  %1253 = vrot.lane.b32.xlu0 %v1152, 16
  %v1254 = vpop.permute.xlu0 %1253
  %1255 = vrot.lane.b32.xlu0 %v1153, 16
  %v1256 = vpop.permute.xlu0 %1255
  %v1257 = vsel %vm167, %v1254, %v1256
  %v1258 = vsel %vm167, %v1252, %v1254
  %v1259 = vsel %vm167, %v1250, %v1252
  %v1260 = vsel %vm167, %v1256, %v1250
  %s1261 = scalar_lea.vmem %s7, 4
  %v1262 = vld [vmem:[%s1261] sm:$0xf]
  %v1263 = vpack.c.bf16 %v1262, %v1262
  %v1264 = vpack.c.bf16 %v1260, %v1260
  %v1265 = vpack.c.bf16 %v1259, %v1259
  %v1266 = vpack.c.bf16 %v1258, %v1258
  %v1267 = vpack.c.bf16 %v1257, %v1257
  %v1269 = vsel %vm1172, %v1263, 0
  %v1272 = vsel %vm1176, %v1264, 0
  %v1275 = vsel %vm1176, %v1265, 0
  %v1278 = vsel %vm1176, %v1266, 0
  %v1281 = vsel %vm1176, %v1267, 0
  %1283 = vmatpush.bf16.msra.mxu0 0
  %1284 = vmatpush.bf16.msra.mxu0 0
  %1285 = vmatpush.bf16.msra.mxu0 0
  %1286 = vmatpush.bf16.msra.mxu0 0
  %1287 = vmatpush.bf16.msra.mxu0 0
  %1288 = vmatpush.bf16.msra.mxu0 0
  %1289 = vmatpush.bf16.msra.mxu0 0
  %1290 = vmatpush.bf16.msra.mxu0 %v1272
  %1291 = vmatmul.bf16.gmra.mxu0 %v1269
  %v1292 = vpop.f32.mrf.mxu0
  %v1293 = vadd.f32 0.0, %v1292
  %v1294 = vpop.f32.mrf.mxu0
  %1295 = vdwg.mxu0
  %1296 = vmatpush.bf16.msra.mxu0 0
  %1297 = vmatpush.bf16.msra.mxu0 0
  %1298 = vmatpush.bf16.msra.mxu0 0
  %1299 = vmatpush.bf16.msra.mxu0 0
  %1300 = vmatpush.bf16.msra.mxu0 0
  %1301 = vmatpush.bf16.msra.mxu0 0
  %1302 = vmatpush.bf16.msra.mxu0 0
  %1303 = vmatpush.bf16.msra.mxu0 %v1275
  %1304 = vmatmul.bf16.gmra.mxu0 %v1269
  %v1305 = vpop.f32.mrf.mxu0
  %v1306 = vadd.f32 0.0, %v1305
  %v1307 = vpop.f32.mrf.mxu0
  %1308 = vdwg.mxu0
  %1309 = vmatpush.bf16.msra.mxu0 0
  %1310 = vmatpush.bf16.msra.mxu0 0
  %1311 = vmatpush.bf16.msra.mxu0 0
  %1312 = vmatpush.bf16.msra.mxu0 0
  %1313 = vmatpush.bf16.msra.mxu0 0
  %1314 = vmatpush.bf16.msra.mxu0 0
  %1315 = vmatpush.bf16.msra.mxu0 0
  %1316 = vmatpush.bf16.msra.mxu0 %v1278
  %1317 = vmatmul.bf16.gmra.mxu0 %v1269
  %v1318 = vpop.f32.mrf.mxu0
  %v1319 = vadd.f32 0.0, %v1318
  %v1320 = vpop.f32.mrf.mxu0
  %1321 = vdwg.mxu0
  %1322 = vmatpush.bf16.msra.mxu0 0
  %1323 = vmatpush.bf16.msra.mxu0 0
  %1324 = vmatpush.bf16.msra.mxu0 0
  %1325 = vmatpush.bf16.msra.mxu0 0
  %1326 = vmatpush.bf16.msra.mxu0 0
  %1327 = vmatpush.bf16.msra.mxu0 0
  %1328 = vmatpush.bf16.msra.mxu0 0
  %1329 = vmatpush.bf16.msra.mxu0 %v1281
  %1330 = vmatmul.bf16.gmra.mxu0 %v1269
  %v1331 = vpop.f32.mrf.mxu0
  %v1332 = vadd.f32 0.0, %v1331
  %v1333 = vpop.f32.mrf.mxu0
  %1334 = vdwg.mxu0
  %v1335 = vmul.f32 %v1293, %v249
  %v1336 = vmul.f32 %v1306, %v250
  %v1337 = vmul.f32 %v1319, %v251
  %v1338 = vmul.f32 %v1332, %v252
  %v1339 = vadd.f32 %v1245, %v1335
  %v1340 = vadd.f32 %v1246, %v1336
  %v1341 = vadd.f32 %v1247, %v1337
  %v1342 = vadd.f32 %v1248, %v1338
  %1343 = vrot.lane.b32.xlu0 %v1150, 15
  %v1344 = vpop.permute.xlu0 %1343
  %1345 = vrot.lane.b32.xlu0 %v1151, 15
  %v1346 = vpop.permute.xlu0 %1345
  %1347 = vrot.lane.b32.xlu0 %v1152, 15
  %v1348 = vpop.permute.xlu0 %1347
  %1349 = vrot.lane.b32.xlu0 %v1153, 15
  %v1350 = vpop.permute.xlu0 %1349
  %v1351 = vsel %vm273, %v1348, %v1350
  %v1352 = vsel %vm273, %v1346, %v1348
  %v1353 = vsel %vm273, %v1344, %v1346
  %v1354 = vsel %vm273, %v1350, %v1344
  %s1355 = scalar_lea.vmem %s7, 8
  %v1356 = vld [vmem:[%s1355] sm:$0xf]
  %v1357 = vpack.c.bf16 %v1356, %v1356
  %v1358 = vpack.c.bf16 %v1354, %v1354
  %v1359 = vpack.c.bf16 %v1353, %v1353
  %v1360 = vpack.c.bf16 %v1352, %v1352
  %v1361 = vpack.c.bf16 %v1351, %v1351
  %v1363 = vsel %vm1172, %v1357, 0
  %v1366 = vsel %vm1176, %v1358, 0
  %v1369 = vsel %vm1176, %v1359, 0
  %v1372 = vsel %vm1176, %v1360, 0
  %v1375 = vsel %vm1176, %v1361, 0
  %1377 = vmatpush.bf16.msra.mxu0 0
  %1378 = vmatpush.bf16.msra.mxu0 0
  %1379 = vmatpush.bf16.msra.mxu0 0
  %1380 = vmatpush.bf16.msra.mxu0 0
  %1381 = vmatpush.bf16.msra.mxu0 0
  %1382 = vmatpush.bf16.msra.mxu0 0
  %1383 = vmatpush.bf16.msra.mxu0 0
  %1384 = vmatpush.bf16.msra.mxu0 %v1366
  %1385 = vmatmul.bf16.gmra.mxu0 %v1363
  %v1386 = vpop.f32.mrf.mxu0
  %v1387 = vadd.f32 0.0, %v1386
  %v1388 = vpop.f32.mrf.mxu0
  %1389 = vdwg.mxu0
  %1390 = vmatpush.bf16.msra.mxu0 0
  %1391 = vmatpush.bf16.msra.mxu0 0
  %1392 = vmatpush.bf16.msra.mxu0 0
  %1393 = vmatpush.bf16.msra.mxu0 0
  %1394 = vmatpush.bf16.msra.mxu0 0
  %1395 = vmatpush.bf16.msra.mxu0 0
  %1396 = vmatpush.bf16.msra.mxu0 0
  %1397 = vmatpush.bf16.msra.mxu0 %v1369
  %1398 = vmatmul.bf16.gmra.mxu0 %v1363
  %v1399 = vpop.f32.mrf.mxu0
  %v1400 = vadd.f32 0.0, %v1399
  %v1401 = vpop.f32.mrf.mxu0
  %1402 = vdwg.mxu0
  %1403 = vmatpush.bf16.msra.mxu0 0
  %1404 = vmatpush.bf16.msra.mxu0 0
  %1405 = vmatpush.bf16.msra.mxu0 0
  %1406 = vmatpush.bf16.msra.mxu0 0
  %1407 = vmatpush.bf16.msra.mxu0 0
  %1408 = vmatpush.bf16.msra.mxu0 0
  %1409 = vmatpush.bf16.msra.mxu0 0
  %1410 = vmatpush.bf16.msra.mxu0 %v1372
  %1411 = vmatmul.bf16.gmra.mxu0 %v1363
  %v1412 = vpop.f32.mrf.mxu0
  %v1413 = vadd.f32 0.0, %v1412
  %v1414 = vpop.f32.mrf.mxu0
  %1415 = vdwg.mxu0
  %1416 = vmatpush.bf16.msra.mxu0 0
  %1417 = vmatpush.bf16.msra.mxu0 0
  %1418 = vmatpush.bf16.msra.mxu0 0
  %1419 = vmatpush.bf16.msra.mxu0 0
  %1420 = vmatpush.bf16.msra.mxu0 0
  %1421 = vmatpush.bf16.msra.mxu0 0
  %1422 = vmatpush.bf16.msra.mxu0 0
  %1423 = vmatpush.bf16.msra.mxu0 %v1375
  %1424 = vmatmul.bf16.gmra.mxu0 %v1363
  %v1425 = vpop.f32.mrf.mxu0
  %v1426 = vadd.f32 0.0, %v1425
  %v1427 = vpop.f32.mrf.mxu0
  %1428 = vdwg.mxu0
  %v1429 = vmul.f32 %v1387, %v355
  %v1430 = vmul.f32 %v1400, %v356
  %v1431 = vmul.f32 %v1413, %v357
  %v1432 = vmul.f32 %v1426, %v358
  %v1433 = vadd.f32 %v1339, %v1429
  %v1434 = vadd.f32 %v1340, %v1430
  %v1435 = vadd.f32 %v1341, %v1431
  %v1436 = vadd.f32 %v1342, %v1432
  %1437 = vrot.lane.b32.xlu0 %v1150, 1
  %v1438 = vpop.permute.xlu0 %1437
  %1439 = vrot.lane.b32.xlu0 %v1151, 1
  %v1440 = vpop.permute.xlu0 %1439
  %1441 = vrot.lane.b32.xlu0 %v1152, 1
  %v1442 = vpop.permute.xlu0 %1441
  %1443 = vrot.lane.b32.xlu0 %v1153, 1
  %v1444 = vpop.permute.xlu0 %1443
  %v1445 = vsel %vm379, %v1442, %v1444
  %v1446 = vsel %vm379, %v1440, %v1442
  %v1447 = vsel %vm379, %v1438, %v1440
  %v1448 = vsel %vm379, %v1444, %v1438
  %s1449 = scalar_lea.vmem %s7, 12
  %v1450 = vld [vmem:[%s1449] sm:$0xf]
  %v1451 = vpack.c.bf16 %v1450, %v1450
  %v1452 = vpack.c.bf16 %v1448, %v1448
  %v1453 = vpack.c.bf16 %v1447, %v1447
  %v1454 = vpack.c.bf16 %v1446, %v1446
  %v1455 = vpack.c.bf16 %v1445, %v1445
  %v1457 = vsel %vm1172, %v1451, 0
  %v1460 = vsel %vm1176, %v1452, 0
  %v1463 = vsel %vm1176, %v1453, 0
  %v1466 = vsel %vm1176, %v1454, 0
  %v1469 = vsel %vm1176, %v1455, 0
  %1471 = vmatpush.bf16.msra.mxu0 0
  %1472 = vmatpush.bf16.msra.mxu0 0
  %1473 = vmatpush.bf16.msra.mxu0 0
  %1474 = vmatpush.bf16.msra.mxu0 0
  %1475 = vmatpush.bf16.msra.mxu0 0
  %1476 = vmatpush.bf16.msra.mxu0 0
  %1477 = vmatpush.bf16.msra.mxu0 0
  %1478 = vmatpush.bf16.msra.mxu0 %v1460
  %1479 = vmatmul.bf16.gmra.mxu0 %v1457
  %v1480 = vpop.f32.mrf.mxu0
  %v1481 = vadd.f32 0.0, %v1480
  %v1482 = vpop.f32.mrf.mxu0
  %1483 = vdwg.mxu0
  %1484 = vmatpush.bf16.msra.mxu0 0
  %1485 = vmatpush.bf16.msra.mxu0 0
  %1486 = vmatpush.bf16.msra.mxu0 0
  %1487 = vmatpush.bf16.msra.mxu0 0
  %1488 = vmatpush.bf16.msra.mxu0 0
  %1489 = vmatpush.bf16.msra.mxu0 0
  %1490 = vmatpush.bf16.msra.mxu0 0
  %1491 = vmatpush.bf16.msra.mxu0 %v1463
  %1492 = vmatmul.bf16.gmra.mxu0 %v1457
  %v1493 = vpop.f32.mrf.mxu0
  %v1494 = vadd.f32 0.0, %v1493
  %v1495 = vpop.f32.mrf.mxu0
  %1496 = vdwg.mxu0
  %1497 = vmatpush.bf16.msra.mxu0 0
  %1498 = vmatpush.bf16.msra.mxu0 0
  %1499 = vmatpush.bf16.msra.mxu0 0
  %1500 = vmatpush.bf16.msra.mxu0 0
  %1501 = vmatpush.bf16.msra.mxu0 0
  %1502 = vmatpush.bf16.msra.mxu0 0
  %1503 = vmatpush.bf16.msra.mxu0 0
  %1504 = vmatpush.bf16.msra.mxu0 %v1466
  %1505 = vmatmul.bf16.gmra.mxu0 %v1457
  %v1506 = vpop.f32.mrf.mxu0
  %v1507 = vadd.f32 0.0, %v1506
  %v1508 = vpop.f32.mrf.mxu0
  %1509 = vdwg.mxu0
  %1510 = vmatpush.bf16.msra.mxu0 0
  %1511 = vmatpush.bf16.msra.mxu0 0
  %1512 = vmatpush.bf16.msra.mxu0 0
  %1513 = vmatpush.bf16.msra.mxu0 0
  %1514 = vmatpush.bf16.msra.mxu0 0
  %1515 = vmatpush.bf16.msra.mxu0 0
  %1516 = vmatpush.bf16.msra.mxu0 0
  %1517 = vmatpush.bf16.msra.mxu0 %v1469
  %1518 = vmatmul.bf16.gmra.mxu0 %v1457
  %v1519 = vpop.f32.mrf.mxu0
  %v1520 = vadd.f32 0.0, %v1519
  %v1521 = vpop.f32.mrf.mxu0
  %1522 = vdwg.mxu0
  %v1523 = vmul.f32 %v1481, %v461
  %v1524 = vmul.f32 %v1494, %v462
  %v1525 = vmul.f32 %v1507, %v463
  %v1526 = vmul.f32 %v1520, %v464
  %v1527 = vadd.f32 %v1433, %v1523
  %v1528 = vadd.f32 %v1434, %v1524
  %v1529 = vadd.f32 %v1435, %v1525
  %v1530 = vadd.f32 %v1436, %v1526
  %s1531 = scalar_lea.vmem %s7, 16
  %v1532 = vld [vmem:[%s1531] sm:$0xf]
  %v1533 = vpack.c.bf16 %v1532, %v1532
  %v1534 = vpack.c.bf16 %v1150, %v1150
  %v1535 = vpack.c.bf16 %v1151, %v1151
  %v1536 = vpack.c.bf16 %v1152, %v1152
  %v1537 = vpack.c.bf16 %v1153, %v1153
  %v1539 = vsel %vm1172, %v1533, 0
  %v1542 = vsel %vm1176, %v1534, 0
  %v1545 = vsel %vm1176, %v1535, 0
  %v1548 = vsel %vm1176, %v1536, 0
  %v1551 = vsel %vm1176, %v1537, 0
  %1553 = vmatpush.bf16.msra.mxu0 0
  %1554 = vmatpush.bf16.msra.mxu0 0
  %1555 = vmatpush.bf16.msra.mxu0 0
  %1556 = vmatpush.bf16.msra.mxu0 0
  %1557 = vmatpush.bf16.msra.mxu0 0
  %1558 = vmatpush.bf16.msra.mxu0 0
  %1559 = vmatpush.bf16.msra.mxu0 0
  %1560 = vmatpush.bf16.msra.mxu0 %v1542
  %1561 = vmatmul.bf16.gmra.mxu0 %v1539
  %v1562 = vpop.f32.mrf.mxu0
  %v1563 = vadd.f32 0.0, %v1562
  %v1564 = vpop.f32.mrf.mxu0
  %1565 = vdwg.mxu0
  %1566 = vmatpush.bf16.msra.mxu0 0
  %1567 = vmatpush.bf16.msra.mxu0 0
  %1568 = vmatpush.bf16.msra.mxu0 0
  %1569 = vmatpush.bf16.msra.mxu0 0
  %1570 = vmatpush.bf16.msra.mxu0 0
  %1571 = vmatpush.bf16.msra.mxu0 0
  %1572 = vmatpush.bf16.msra.mxu0 0
  %1573 = vmatpush.bf16.msra.mxu0 %v1545
  %1574 = vmatmul.bf16.gmra.mxu0 %v1539
  %v1575 = vpop.f32.mrf.mxu0
  %v1576 = vadd.f32 0.0, %v1575
  %v1577 = vpop.f32.mrf.mxu0
  %1578 = vdwg.mxu0
  %1579 = vmatpush.bf16.msra.mxu0 0
  %1580 = vmatpush.bf16.msra.mxu0 0
  %1581 = vmatpush.bf16.msra.mxu0 0
  %1582 = vmatpush.bf16.msra.mxu0 0
  %1583 = vmatpush.bf16.msra.mxu0 0
  %1584 = vmatpush.bf16.msra.mxu0 0
  %1585 = vmatpush.bf16.msra.mxu0 0
  %1586 = vmatpush.bf16.msra.mxu0 %v1548
  %1587 = vmatmul.bf16.gmra.mxu0 %v1539
  %v1588 = vpop.f32.mrf.mxu0
  %v1589 = vadd.f32 0.0, %v1588
  %v1590 = vpop.f32.mrf.mxu0
  %1591 = vdwg.mxu0
  %1592 = vmatpush.bf16.msra.mxu0 0
  %1593 = vmatpush.bf16.msra.mxu0 0
  %1594 = vmatpush.bf16.msra.mxu0 0
  %1595 = vmatpush.bf16.msra.mxu0 0
  %1596 = vmatpush.bf16.msra.mxu0 0
  %1597 = vmatpush.bf16.msra.mxu0 0
  %1598 = vmatpush.bf16.msra.mxu0 0
  %1599 = vmatpush.bf16.msra.mxu0 %v1551
  %1600 = vmatmul.bf16.gmra.mxu0 %v1539
  %v1601 = vpop.f32.mrf.mxu0
  %v1602 = vadd.f32 0.0, %v1601
  %v1603 = vpop.f32.mrf.mxu0
  %1604 = vdwg.mxu0
  %v1605 = vadd.f32 %v1527, %v1563
  %v1606 = vadd.f32 %v1528, %v1576
  %v1607 = vadd.f32 %v1529, %v1589
  %v1608 = vadd.f32 %v1530, %v1602
  %1609 = vrot.lane.b32.xlu0 %v1150, 127
  %v1610 = vpop.permute.xlu0 %1609
  %1611 = vrot.lane.b32.xlu0 %v1151, 127
  %v1612 = vpop.permute.xlu0 %1611
  %1613 = vrot.lane.b32.xlu0 %v1152, 127
  %v1614 = vpop.permute.xlu0 %1613
  %1615 = vrot.lane.b32.xlu0 %v1153, 127
  %v1616 = vpop.permute.xlu0 %1615
  %v1617 = vsel %vm563, %v1614, %v1616
  %v1618 = vsel %vm563, %v1612, %v1614
  %v1619 = vsel %vm563, %v1610, %v1612
  %v1620 = vsel %vm563, %v1616, %v1610
  %s1621 = scalar_lea.vmem %s7, 20
  %v1622 = vld [vmem:[%s1621] sm:$0xf]
  %v1623 = vpack.c.bf16 %v1622, %v1622
  %v1624 = vpack.c.bf16 %v1619, %v1619
  %v1625 = vpack.c.bf16 %v1618, %v1618
  %v1626 = vpack.c.bf16 %v1617, %v1617
  %v1627 = vpack.c.bf16 %v1620, %v1620
  %v1629 = vsel %vm1172, %v1623, 0
  %v1632 = vsel %vm1176, %v1624, 0
  %v1635 = vsel %vm1176, %v1625, 0
  %v1638 = vsel %vm1176, %v1626, 0
  %v1641 = vsel %vm1176, %v1627, 0
  %1643 = vmatpush.bf16.msra.mxu0 0
  %1644 = vmatpush.bf16.msra.mxu0 0
  %1645 = vmatpush.bf16.msra.mxu0 0
  %1646 = vmatpush.bf16.msra.mxu0 0
  %1647 = vmatpush.bf16.msra.mxu0 0
  %1648 = vmatpush.bf16.msra.mxu0 0
  %1649 = vmatpush.bf16.msra.mxu0 0
  %1650 = vmatpush.bf16.msra.mxu0 %v1632
  %1651 = vmatmul.bf16.gmra.mxu0 %v1629
  %v1652 = vpop.f32.mrf.mxu0
  %v1653 = vadd.f32 0.0, %v1652
  %v1654 = vpop.f32.mrf.mxu0
  %1655 = vdwg.mxu0
  %1656 = vmatpush.bf16.msra.mxu0 0
  %1657 = vmatpush.bf16.msra.mxu0 0
  %1658 = vmatpush.bf16.msra.mxu0 0
  %1659 = vmatpush.bf16.msra.mxu0 0
  %1660 = vmatpush.bf16.msra.mxu0 0
  %1661 = vmatpush.bf16.msra.mxu0 0
  %1662 = vmatpush.bf16.msra.mxu0 0
  %1663 = vmatpush.bf16.msra.mxu0 %v1635
  %1664 = vmatmul.bf16.gmra.mxu0 %v1629
  %v1665 = vpop.f32.mrf.mxu0
  %v1666 = vadd.f32 0.0, %v1665
  %v1667 = vpop.f32.mrf.mxu0
  %1668 = vdwg.mxu0
  %1669 = vmatpush.bf16.msra.mxu0 0
  %1670 = vmatpush.bf16.msra.mxu0 0
  %1671 = vmatpush.bf16.msra.mxu0 0
  %1672 = vmatpush.bf16.msra.mxu0 0
  %1673 = vmatpush.bf16.msra.mxu0 0
  %1674 = vmatpush.bf16.msra.mxu0 0
  %1675 = vmatpush.bf16.msra.mxu0 0
  %1676 = vmatpush.bf16.msra.mxu0 %v1638
  %1677 = vmatmul.bf16.gmra.mxu0 %v1629
  %v1678 = vpop.f32.mrf.mxu0
  %v1679 = vadd.f32 0.0, %v1678
  %v1680 = vpop.f32.mrf.mxu0
  %1681 = vdwg.mxu0
  %1682 = vmatpush.bf16.msra.mxu0 0
  %1683 = vmatpush.bf16.msra.mxu0 0
  %1684 = vmatpush.bf16.msra.mxu0 0
  %1685 = vmatpush.bf16.msra.mxu0 0
  %1686 = vmatpush.bf16.msra.mxu0 0
  %1687 = vmatpush.bf16.msra.mxu0 0
  %1688 = vmatpush.bf16.msra.mxu0 0
  %1689 = vmatpush.bf16.msra.mxu0 %v1641
  %1690 = vmatmul.bf16.gmra.mxu0 %v1629
  %v1691 = vpop.f32.mrf.mxu0
  %v1692 = vadd.f32 0.0, %v1691
  %v1693 = vpop.f32.mrf.mxu0
  %1694 = vdwg.mxu0
  %v1695 = vmul.f32 %v1653, %v645
  %v1696 = vmul.f32 %v1666, %v646
  %v1697 = vmul.f32 %v1679, %v647
  %v1698 = vmul.f32 %v1692, %v648
  %v1699 = vadd.f32 %v1605, %v1695
  %v1700 = vadd.f32 %v1606, %v1696
  %v1701 = vadd.f32 %v1607, %v1697
  %v1702 = vadd.f32 %v1608, %v1698
  %1703 = vrot.lane.b32.xlu0 %v1150, 113
  %v1704 = vpop.permute.xlu0 %1703
  %1705 = vrot.lane.b32.xlu0 %v1151, 113
  %v1706 = vpop.permute.xlu0 %1705
  %1707 = vrot.lane.b32.xlu0 %v1152, 113
  %v1708 = vpop.permute.xlu0 %1707
  %1709 = vrot.lane.b32.xlu0 %v1153, 113
  %v1710 = vpop.permute.xlu0 %1709
  %v1711 = vsel %vm669, %v1708, %v1710
  %v1712 = vsel %vm669, %v1706, %v1708
  %v1713 = vsel %vm669, %v1704, %v1706
  %v1714 = vsel %vm669, %v1710, %v1704
  %s1715 = scalar_lea.vmem %s7, 24
  %v1716 = vld [vmem:[%s1715] sm:$0xf]
  %v1717 = vpack.c.bf16 %v1716, %v1716
  %v1718 = vpack.c.bf16 %v1713, %v1713
  %v1719 = vpack.c.bf16 %v1712, %v1712
  %v1720 = vpack.c.bf16 %v1711, %v1711
  %v1721 = vpack.c.bf16 %v1714, %v1714
  %v1723 = vsel %vm1172, %v1717, 0
  %v1726 = vsel %vm1176, %v1718, 0
  %v1729 = vsel %vm1176, %v1719, 0
  %v1732 = vsel %vm1176, %v1720, 0
  %v1735 = vsel %vm1176, %v1721, 0
  %1737 = vmatpush.bf16.msra.mxu0 0
  %1738 = vmatpush.bf16.msra.mxu0 0
  %1739 = vmatpush.bf16.msra.mxu0 0
  %1740 = vmatpush.bf16.msra.mxu0 0
  %1741 = vmatpush.bf16.msra.mxu0 0
  %1742 = vmatpush.bf16.msra.mxu0 0
  %1743 = vmatpush.bf16.msra.mxu0 0
  %1744 = vmatpush.bf16.msra.mxu0 %v1726
  %1745 = vmatmul.bf16.gmra.mxu0 %v1723
  %v1746 = vpop.f32.mrf.mxu0
  %v1747 = vadd.f32 0.0, %v1746
  %v1748 = vpop.f32.mrf.mxu0
  %1749 = vdwg.mxu0
  %1750 = vmatpush.bf16.msra.mxu0 0
  %1751 = vmatpush.bf16.msra.mxu0 0
  %1752 = vmatpush.bf16.msra.mxu0 0
  %1753 = vmatpush.bf16.msra.mxu0 0
  %1754 = vmatpush.bf16.msra.mxu0 0
  %1755 = vmatpush.bf16.msra.mxu0 0
  %1756 = vmatpush.bf16.msra.mxu0 0
  %1757 = vmatpush.bf16.msra.mxu0 %v1729
  %1758 = vmatmul.bf16.gmra.mxu0 %v1723
  %v1759 = vpop.f32.mrf.mxu0
  %v1760 = vadd.f32 0.0, %v1759
  %v1761 = vpop.f32.mrf.mxu0
  %1762 = vdwg.mxu0
  %1763 = vmatpush.bf16.msra.mxu0 0
  %1764 = vmatpush.bf16.msra.mxu0 0
  %1765 = vmatpush.bf16.msra.mxu0 0
  %1766 = vmatpush.bf16.msra.mxu0 0
  %1767 = vmatpush.bf16.msra.mxu0 0
  %1768 = vmatpush.bf16.msra.mxu0 0
  %1769 = vmatpush.bf16.msra.mxu0 0
  %1770 = vmatpush.bf16.msra.mxu0 %v1732
  %1771 = vmatmul.bf16.gmra.mxu0 %v1723
  %v1772 = vpop.f32.mrf.mxu0
  %v1773 = vadd.f32 0.0, %v1772
  %v1774 = vpop.f32.mrf.mxu0
  %1775 = vdwg.mxu0
  %1776 = vmatpush.bf16.msra.mxu0 0
  %1777 = vmatpush.bf16.msra.mxu0 0
  %1778 = vmatpush.bf16.msra.mxu0 0
  %1779 = vmatpush.bf16.msra.mxu0 0
  %1780 = vmatpush.bf16.msra.mxu0 0
  %1781 = vmatpush.bf16.msra.mxu0 0
  %1782 = vmatpush.bf16.msra.mxu0 0
  %1783 = vmatpush.bf16.msra.mxu0 %v1735
  %1784 = vmatmul.bf16.gmra.mxu0 %v1723
  %v1785 = vpop.f32.mrf.mxu0
  %v1786 = vadd.f32 0.0, %v1785
  %v1787 = vpop.f32.mrf.mxu0
  %1788 = vdwg.mxu0
  %v1789 = vmul.f32 %v1747, %v751
  %v1790 = vmul.f32 %v1760, %v752
  %v1791 = vmul.f32 %v1773, %v753
  %v1792 = vmul.f32 %v1786, %v754
  %v1793 = vadd.f32 %v1699, %v1789
  %v1794 = vadd.f32 %v1700, %v1790
  %v1795 = vadd.f32 %v1701, %v1791
  %v1796 = vadd.f32 %v1702, %v1792
  %1797 = vrot.lane.b32.xlu0 %v1150, 112
  %v1798 = vpop.permute.xlu0 %1797
  %1799 = vrot.lane.b32.xlu0 %v1151, 112
  %v1800 = vpop.permute.xlu0 %1799
  %1801 = vrot.lane.b32.xlu0 %v1152, 112
  %v1802 = vpop.permute.xlu0 %1801
  %1803 = vrot.lane.b32.xlu0 %v1153, 112
  %v1804 = vpop.permute.xlu0 %1803
  %v1805 = vsel %vm775, %v1802, %v1804
  %v1806 = vsel %vm775, %v1800, %v1802
  %v1807 = vsel %vm775, %v1798, %v1800
  %v1808 = vsel %vm775, %v1804, %v1798
  %s1809 = scalar_lea.vmem %s7, 28
  %v1810 = vld [vmem:[%s1809] sm:$0xf]
  %v1811 = vpack.c.bf16 %v1810, %v1810
  %v1812 = vpack.c.bf16 %v1807, %v1807
  %v1813 = vpack.c.bf16 %v1806, %v1806
  %v1814 = vpack.c.bf16 %v1805, %v1805
  %v1815 = vpack.c.bf16 %v1808, %v1808
  %v1817 = vsel %vm1172, %v1811, 0
  %v1820 = vsel %vm1176, %v1812, 0
  %v1823 = vsel %vm1176, %v1813, 0
  %v1826 = vsel %vm1176, %v1814, 0
  %v1829 = vsel %vm1176, %v1815, 0
  %1831 = vmatpush.bf16.msra.mxu0 0
  %1832 = vmatpush.bf16.msra.mxu0 0
  %1833 = vmatpush.bf16.msra.mxu0 0
  %1834 = vmatpush.bf16.msra.mxu0 0
  %1835 = vmatpush.bf16.msra.mxu0 0
  %1836 = vmatpush.bf16.msra.mxu0 0
  %1837 = vmatpush.bf16.msra.mxu0 0
  %1838 = vmatpush.bf16.msra.mxu0 %v1820
  %1839 = vmatmul.bf16.gmra.mxu0 %v1817
  %v1840 = vpop.f32.mrf.mxu0
  %v1841 = vadd.f32 0.0, %v1840
  %v1842 = vpop.f32.mrf.mxu0
  %1843 = vdwg.mxu0
  %1844 = vmatpush.bf16.msra.mxu0 0
  %1845 = vmatpush.bf16.msra.mxu0 0
  %1846 = vmatpush.bf16.msra.mxu0 0
  %1847 = vmatpush.bf16.msra.mxu0 0
  %1848 = vmatpush.bf16.msra.mxu0 0
  %1849 = vmatpush.bf16.msra.mxu0 0
  %1850 = vmatpush.bf16.msra.mxu0 0
  %1851 = vmatpush.bf16.msra.mxu0 %v1823
  %1852 = vmatmul.bf16.gmra.mxu0 %v1817
  %v1853 = vpop.f32.mrf.mxu0
  %v1854 = vadd.f32 0.0, %v1853
  %v1855 = vpop.f32.mrf.mxu0
  %1856 = vdwg.mxu0
  %1857 = vmatpush.bf16.msra.mxu0 0
  %1858 = vmatpush.bf16.msra.mxu0 0
  %1859 = vmatpush.bf16.msra.mxu0 0
  %1860 = vmatpush.bf16.msra.mxu0 0
  %1861 = vmatpush.bf16.msra.mxu0 0
  %1862 = vmatpush.bf16.msra.mxu0 0
  %1863 = vmatpush.bf16.msra.mxu0 0
  %1864 = vmatpush.bf16.msra.mxu0 %v1826
  %1865 = vmatmul.bf16.gmra.mxu0 %v1817
  %v1866 = vpop.f32.mrf.mxu0
  %v1867 = vadd.f32 0.0, %v1866
  %v1868 = vpop.f32.mrf.mxu0
  %1869 = vdwg.mxu0
  %1870 = vmatpush.bf16.msra.mxu0 0
  %1871 = vmatpush.bf16.msra.mxu0 0
  %1872 = vmatpush.bf16.msra.mxu0 0
  %1873 = vmatpush.bf16.msra.mxu0 0
  %1874 = vmatpush.bf16.msra.mxu0 0
  %1875 = vmatpush.bf16.msra.mxu0 0
  %1876 = vmatpush.bf16.msra.mxu0 0
  %1877 = vmatpush.bf16.msra.mxu0 %v1829
  %1878 = vmatmul.bf16.gmra.mxu0 %v1817
  %v1879 = vpop.f32.mrf.mxu0
  %v1880 = vadd.f32 0.0, %v1879
  %v1881 = vpop.f32.mrf.mxu0
  %1882 = vdwg.mxu0
  %v1883 = vmul.f32 %v1841, %v857
  %v1884 = vmul.f32 %v1854, %v858
  %v1885 = vmul.f32 %v1867, %v859
  %v1886 = vmul.f32 %v1880, %v860
  %v1887 = vadd.f32 %v1793, %v1883
  %v1888 = vadd.f32 %v1794, %v1884
  %v1889 = vadd.f32 %v1795, %v1885
  %v1890 = vadd.f32 %v1796, %v1886
  %1891 = vrot.lane.b32.xlu0 %v1150, 111
  %v1892 = vpop.permute.xlu0 %1891
  %1893 = vrot.lane.b32.xlu0 %v1151, 111
  %v1894 = vpop.permute.xlu0 %1893
  %1895 = vrot.lane.b32.xlu0 %v1152, 111
  %v1896 = vpop.permute.xlu0 %1895
  %1897 = vrot.lane.b32.xlu0 %v1153, 111
  %v1898 = vpop.permute.xlu0 %1897
  %v1899 = vsel %vm881, %v1896, %v1898
  %v1900 = vsel %vm881, %v1894, %v1896
  %v1901 = vsel %vm881, %v1892, %v1894
  %v1902 = vsel %vm881, %v1898, %v1892
  %s1903 = scalar_lea.vmem %s7, 32
  %v1904 = vld [vmem:[%s1903] sm:$0xf]
  %v1905 = vpack.c.bf16 %v1904, %v1904
  %v1906 = vpack.c.bf16 %v1901, %v1901
  %v1907 = vpack.c.bf16 %v1900, %v1900
  %v1908 = vpack.c.bf16 %v1899, %v1899
  %v1909 = vpack.c.bf16 %v1902, %v1902
  %v1911 = vsel %vm1172, %v1905, 0
  %v1914 = vsel %vm1176, %v1906, 0
  %v1917 = vsel %vm1176, %v1907, 0
  %v1920 = vsel %vm1176, %v1908, 0
  %v1923 = vsel %vm1176, %v1909, 0
  %1925 = vmatpush.bf16.msra.mxu0 0
  %1926 = vmatpush.bf16.msra.mxu0 0
  %1927 = vmatpush.bf16.msra.mxu0 0
  %1928 = vmatpush.bf16.msra.mxu0 0
  %1929 = vmatpush.bf16.msra.mxu0 0
  %1930 = vmatpush.bf16.msra.mxu0 0
  %1931 = vmatpush.bf16.msra.mxu0 0
  %1932 = vmatpush.bf16.msra.mxu0 %v1914
  %1933 = vmatmul.bf16.gmra.mxu0 %v1911
  %v1934 = vpop.f32.mrf.mxu0
  %v1935 = vadd.f32 0.0, %v1934
  %v1936 = vpop.f32.mrf.mxu0
  %1937 = vdwg.mxu0
  %1938 = vmatpush.bf16.msra.mxu0 0
  %1939 = vmatpush.bf16.msra.mxu0 0
  %1940 = vmatpush.bf16.msra.mxu0 0
  %1941 = vmatpush.bf16.msra.mxu0 0
  %1942 = vmatpush.bf16.msra.mxu0 0
  %1943 = vmatpush.bf16.msra.mxu0 0
  %1944 = vmatpush.bf16.msra.mxu0 0
  %1945 = vmatpush.bf16.msra.mxu0 %v1917
  %1946 = vmatmul.bf16.gmra.mxu0 %v1911
  %v1947 = vpop.f32.mrf.mxu0
  %v1948 = vadd.f32 0.0, %v1947
  %v1949 = vpop.f32.mrf.mxu0
  %1950 = vdwg.mxu0
  %1951 = vmatpush.bf16.msra.mxu0 0
  %1952 = vmatpush.bf16.msra.mxu0 0
  %1953 = vmatpush.bf16.msra.mxu0 0
  %1954 = vmatpush.bf16.msra.mxu0 0
  %1955 = vmatpush.bf16.msra.mxu0 0
  %1956 = vmatpush.bf16.msra.mxu0 0
  %1957 = vmatpush.bf16.msra.mxu0 0
  %1958 = vmatpush.bf16.msra.mxu0 %v1920
  %1959 = vmatmul.bf16.gmra.mxu0 %v1911
  %v1960 = vpop.f32.mrf.mxu0
  %v1961 = vadd.f32 0.0, %v1960
  %v1962 = vpop.f32.mrf.mxu0
  %1963 = vdwg.mxu0
  %1964 = vmatpush.bf16.msra.mxu0 0
  %1965 = vmatpush.bf16.msra.mxu0 0
  %1966 = vmatpush.bf16.msra.mxu0 0
  %1967 = vmatpush.bf16.msra.mxu0 0
  %1968 = vmatpush.bf16.msra.mxu0 0
  %1969 = vmatpush.bf16.msra.mxu0 0
  %1970 = vmatpush.bf16.msra.mxu0 0
  %1971 = vmatpush.bf16.msra.mxu0 %v1923
  %1972 = vmatmul.bf16.gmra.mxu0 %v1911
  %v1973 = vpop.f32.mrf.mxu0
  %v1974 = vadd.f32 0.0, %v1973
  %v1975 = vpop.f32.mrf.mxu0
  %1976 = vdwg.mxu0
  %v1977 = vmul.f32 %v1935, %v963
  %v1978 = vmul.f32 %v1948, %v964
  %v1979 = vmul.f32 %v1961, %v965
  %v1980 = vmul.f32 %v1974, %v966
  %v1981 = vadd.f32 %v1887, %v1977
  %v1982 = vadd.f32 %v1888, %v1978
  %v1983 = vadd.f32 %v1889, %v1979
  %v1984 = vadd.f32 %v1890, %v1980
  %v1985 = vld [vmem:[%s8] sm:$0xf]
  %v1986 = vld [vmem:[%s9] sm:$0xf]
  %v1987 = vsel %vm76, %v1981, 0.0
  %v1988 = vsel %vm76, %v1982, 0.0
  %v1989 = vadd.f32 %v1987, %v1988
  %v1990 = vsel %vm76, %v1983, 0.0
  %v1991 = vadd.f32 %v1989, %v1990
  %v1992 = vsel %vm76, %v1984, 0.0
  %v1993 = vadd.f32 %v1991, %v1992
  %1994 = vadd.xlane.f32.xlu0 %v1993
  %v1995 = vpop.xlane.xlu0 %1994
  %v1996 = vmul.f32 %v1995, 0.001953125
  %v1997 = vmul.f32 %v1981, %v1981
  %v1998 = vmul.f32 %v1982, %v1982
  %v1999 = vmul.f32 %v1983, %v1983
  %v2000 = vmul.f32 %v1984, %v1984
  %v2001 = vsel %vm76, %v1997, 0.0
  %v2002 = vsel %vm76, %v1998, 0.0
  %v2003 = vadd.f32 %v2001, %v2002
  %v2004 = vsel %vm76, %v1999, 0.0
  %v2005 = vadd.f32 %v2003, %v2004
  %v2006 = vsel %vm76, %v2000, 0.0
  %v2007 = vadd.f32 %v2005, %v2006
  %2008 = vadd.xlane.f32.xlu0 %v2007
  %v2009 = vpop.xlane.xlu0 %2008
  %v2010 = vmul.f32 %v2009, 0.001953125
  %v2011 = vmul.f32 %v1996, %v1996
  %v2012 = vsub.f32 %v2010, %v2011
  %v2013 = vmax.f32 %v2012, 0.0
  %v2014 = vadd.f32 %v2013, 1e-05
  %v2015 = vrsqrt.pop %v2014
  %v2016 = vmul.f32 %v2015, %v2014
  %v2017 = vmul.f32 %v2016, %v2015
  %v2018 = vmul.f32 0.5, %v2017
  %v2019 = vsub.f32 1.5, %v2018
  %v2020 = vmul.f32 %v2015, %v2019
  %vm2021 = vweird.f32 %v2014
  %vm2022 = vweird.f32 %v2015
  %vm2023 = vmor %vm2021, %vm2022
  %v2024 = vsel %vm2023, %v2015, %v2020
  %v2025 = vmul.f32 %v1985, %v2024
  %2027 = vset.pattern.permute.xlu0 0
  %2028 = vperm.xlu0 %2027, %v2025
  %v2029 = vpop.permute.xlu0 %2028
  %v2031 = vmul.f32 %v1981, %v2029
  %v2032 = vmul.f32 %v1982, %v2029
  %v2033 = vmul.f32 %v1983, %v2029
  %v2034 = vmul.f32 %v1984, %v2029
  %v2035 = vmul.f32 %v1996, %v2025
  %v2036 = vsub.f32 %v1986, %v2035
  %2038 = vset.pattern.permute.xlu0 0
  %2039 = vperm.xlu0 %2038, %v2036
  %v2040 = vpop.permute.xlu0 %2039
  %v2042 = vadd.f32 %v2031, %v2040
  %v2043 = vadd.f32 %v2032, %v2040
  %v2044 = vadd.f32 %v2033, %v2040
  %v2045 = vadd.f32 %v2034, %v2040
  %v2046 = vmax.f32 %v2042, 0.0
  %v2047 = vmax.f32 %v2043, 0.0
  %v2048 = vmax.f32 %v2044, 0.0
  %v2049 = vmax.f32 %v2045, 0.0
  %v2050 = vld [vmem:[%s10] sm:$0x1]
  %v2051 = vld [vmem:[#allocation2] sm:$0x1]
  %2053 = vset.pattern.permute.xlu0 0
  %2054 = vperm.xlu0 %2053, %v2051
  %v2055 = vpop.permute.xlu0 %2054
  %v2057 = vperm.slane %v2055, 0
  %v2059 = vsel %vm1172, %v2050, 0
  %v2062 = vsel %vm76, %v2046, 0
  %v2065 = vsel %vm76, %v2047, 0
  %v2068 = vsel %vm76, %v2048, 0
  %v2071 = vsel %vm76, %v2049, 0
  %2073 = vmatpush.msra.mxu0 0.0
  %2074 = vmatpush.msra.mxu0 0.0
  %2075 = vmatpush.msra.mxu0 0.0
  %2076 = vmatpush.msra.mxu0 0.0
  %2077 = vmatpush.msra.mxu0 0.0
  %2078 = vmatpush.msra.mxu0 0.0
  %2079 = vmatpush.msra.mxu0 0.0
  %2080 = vmatpush.msra.mxu0 0.0
  %2081 = vmatpush.msra.mxu0 0.0
  %2082 = vmatpush.msra.mxu0 0.0
  %2083 = vmatpush.msra.mxu0 0.0
  %2084 = vmatpush.msra.mxu0 0.0
  %2085 = vmatpush.msra.mxu0 0.0
  %2086 = vmatpush.msra.mxu0 0.0
  %2087 = vmatpush.msra.mxu0 0.0
  %2088 = vmatpush.msra.mxu0 %v2062
  %2089 = vmatmul.f32.gmra.mxu0 %v2059
  %v2090 = vpop.f32.mrf.mxu0
  %v2091 = vadd.f32 %v2057, %v2090
  %2092 = vdwg.mxu0
  %2093 = vmatpush.msra.mxu0 0.0
  %2094 = vmatpush.msra.mxu0 0.0
  %2095 = vmatpush.msra.mxu0 0.0
  %2096 = vmatpush.msra.mxu0 0.0
  %2097 = vmatpush.msra.mxu0 0.0
  %2098 = vmatpush.msra.mxu0 0.0
  %2099 = vmatpush.msra.mxu0 0.0
  %2100 = vmatpush.msra.mxu0 0.0
  %2101 = vmatpush.msra.mxu0 0.0
  %2102 = vmatpush.msra.mxu0 0.0
  %2103 = vmatpush.msra.mxu0 0.0
  %2104 = vmatpush.msra.mxu0 0.0
  %2105 = vmatpush.msra.mxu0 0.0
  %2106 = vmatpush.msra.mxu0 0.0
  %2107 = vmatpush.msra.mxu0 0.0
  %2108 = vmatpush.msra.mxu0 %v2065
  %2109 = vmatmul.f32.gmra.mxu0 %v2059
  %v2110 = vpop.f32.mrf.mxu0
  %v2111 = vadd.f32 %v2057, %v2110
  %2112 = vdwg.mxu0
  %2113 = vmatpush.msra.mxu0 0.0
  %2114 = vmatpush.msra.mxu0 0.0
  %2115 = vmatpush.msra.mxu0 0.0
  %2116 = vmatpush.msra.mxu0 0.0
  %2117 = vmatpush.msra.mxu0 0.0
  %2118 = vmatpush.msra.mxu0 0.0
  %2119 = vmatpush.msra.mxu0 0.0
  %2120 = vmatpush.msra.mxu0 0.0
  %2121 = vmatpush.msra.mxu0 0.0
  %2122 = vmatpush.msra.mxu0 0.0
  %2123 = vmatpush.msra.mxu0 0.0
  %2124 = vmatpush.msra.mxu0 0.0
  %2125 = vmatpush.msra.mxu0 0.0
  %2126 = vmatpush.msra.mxu0 0.0
  %2127 = vmatpush.msra.mxu0 0.0
  %2128 = vmatpush.msra.mxu0 %v2068
  %2129 = vmatmul.f32.gmra.mxu0 %v2059
  %v2130 = vpop.f32.mrf.mxu0
  %v2131 = vadd.f32 %v2057, %v2130
  %2132 = vdwg.mxu0
  %2133 = vmatpush.msra.mxu0 0.0
  %2134 = vmatpush.msra.mxu0 0.0
  %2135 = vmatpush.msra.mxu0 0.0
  %2136 = vmatpush.msra.mxu0 0.0
  %2137 = vmatpush.msra.mxu0 0.0
  %2138 = vmatpush.msra.mxu0 0.0
  %2139 = vmatpush.msra.mxu0 0.0
  %2140 = vmatpush.msra.mxu0 0.0
  %2141 = vmatpush.msra.mxu0 0.0
  %2142 = vmatpush.msra.mxu0 0.0
  %2143 = vmatpush.msra.mxu0 0.0
  %2144 = vmatpush.msra.mxu0 0.0
  %2145 = vmatpush.msra.mxu0 0.0
  %2146 = vmatpush.msra.mxu0 0.0
  %2147 = vmatpush.msra.mxu0 0.0
  %2148 = vmatpush.msra.mxu0 %v2071
  %2149 = vmatmul.f32.gmra.mxu0 %v2059
  %v2150 = vpop.f32.mrf.mxu0
  %v2151 = vadd.f32 %v2057, %v2150
  %2152 = vdwg.mxu0
  %v2153 = vrot.slane %v2047, 4
  %v2154 = vsel %vm76, %v2046, %v2153
  %2156 = vst [vmem:[%s12] sm:$0xff] %v2154
  %v2159 = vrot.slane %v2111, 7
  %vm2160 = vcmask 1040384
  %v2161 = vsel %vm2160, %v2091, %v2159
  %v2163 = vlaneseq
  %vm2164 = vcmp.ge.s32.totalorder %v2163, 0
  %vm2165 = vcmp.lt.s32.totalorder %v2163, 256
  %vm2166 = vmand %vm2164, %vm2165
  %2167 = vst.msk [vmem:[%s13] sm:$0x3] %vm2166, %v2161
  %v2168 = vrot.slane %v2049, 4
  %v2169 = vsel %vm76, %v2048, %v2168
  %s2171 = scalar_lea.vmem %s12, 8
  %2172 = vst [vmem:[%s2171] sm:$0xff] %v2169
  %v2175 = vrot.slane %v2151, 7
  %v2176 = vsel %vm2160, %v2131, %v2175
  %s2178 = scalar_lea.vmem %s13, 2
  %2179 = vst.msk [vmem:[%s2178] sm:$0x3] %vm2166, %v2176
  // Predicated region
  $region50: #{decoder_forward.1} parent=0 // pred_check
    _
  $region51: #{decoder_forward.1} parent=0 // pred_check_branch
    %2181 = sbr.rel (0) target = $region53
  $region52: #{decoder_forward.1} parent=0 // pred_region
    _
  $region53: #{decoder_forward.1} parent=0 // pred_fallthru
    _
  // Predicated region
  $region54: #{decoder_forward.1} parent=0 // pred_check
    _
  $region55: #{decoder_forward.1} parent=0 // pred_check_branch
    %2183 = sbr.rel (0) target = $region57
  $region56: #{decoder_forward.1} parent=0 // pred_region
    _
  $region57: #{decoder_forward.1} parent=0 // pred_fallthru
    _
  // Predicated region
  $region58: #{decoder_forward.1} parent=0 // pred_check
    _
  $region59: #{decoder_forward.1} parent=0 // pred_check_branch
    %2185 = sbr.rel (0) target = $region61
  $region60: #{decoder_forward.1} parent=0 // pred_region
    _
  $region61: #{decoder_forward.1} parent=0 // pred_fallthru
    _
  // Predicated region
  $region62: #{decoder_forward.1} parent=0 // pred_check
    _
  $region63: #{decoder_forward.1} parent=0 // pred_check_branch
    %2187 = sbr.rel (0) target = $region65
  $region64: #{decoder_forward.1} parent=0 // pred_region
    _
  $region65: #{decoder_forward.1} parent=0 // pred_fallthru
    _

</llo_original>
